<compile_context>
chip_gen: v7x
topology: tpu7x:2x2x1
jax: 0.10.0
libtpu: 0.0.40
codegen_flags: <defaults>
</compile_context>

<pallas_src>
import numpy as np
import jax
import jax.numpy as jnp
from jax.experimental import pallas as pl
from jax.experimental.pallas import tpu as pltpu


def mapping_rotate_kernel(w_ref, p_ref, out_ref):
    """One grid step: all rotations for `c` consecutive output planes.

    w_ref   : (c*nIn, E)          weight tile, (plane, input-plane) rows fused
    p_ref   : (nRot, E, E)        bf16 one-hot permutations, resident across the grid
    out_ref : (c, nRot, nIn, E)   output tile, already in the final HBM layout
    """
    c, n_rot, n_in, _ = out_ref.shape
    w = w_ref[...]                                   # load the weight tile once per step
    for k in range(n_rot):                           # nRot <= 8: trace-time unroll
        # 0/1 entries are exact in bf16; upcast once so the dot is a plain f32 matmul.
        perm = p_ref[k].astype(jnp.float32)          # (E, E)
        # One fused (c*nIn, E) @ (E, E) matmul per rotation instead of c small dots.
        res = jnp.dot(w, perm, preferred_element_type=jnp.float32)   # (c*nIn, E)
        for ci in range(c):                          # static row-block stores
            out_ref[ci, k] = res[ci * n_in:(ci + 1) * n_in].astype(out_ref.dtype)


def _device_kind():
    try:
        return jax.devices()[0].device_kind.lower()
    except Exception:
        return ""


def _pick_chunk(n_out, n_in, n_rot, n_entry, max_bytes, max_unroll=32):
    """Largest plane-chunk c dividing n_out whose double-buffered tiles fit max_bytes.

    Prefers c with (c*n_in) % 8 == 0 (or the full array) so the fused weight block's
    sublane dimension stays tile-aligned.
    """
    itemsize = 4

    def fits(c):
        w_tile = c * n_in * n_entry * itemsize
        o_tile = c * n_rot * n_in * n_entry * itemsize
        return 2 * (w_tile + o_tile) <= max_bytes

    def aligned(c):
        return (c * n_in) % 8 == 0 or c == n_out

    best = 0
    for c in range(1, min(n_out, max_unroll) + 1):
        if n_out % c == 0 and fits(c) and aligned(c):
            best = c
    if best == 0:
        for c in range(1, min(n_out, max_unroll) + 1):
            if n_out % c == 0 and fits(c):
                best = c
    return max(best, 1)


def mapping_rotate(weight, indices):
    """Pallas implementation of MappingRotate.forward(input, indices)."""
    nOut, nIn, nOri, kH, kW = weight.shape
    nRot = indices.shape[-1]
    E = nOri * kH * kW

    # Fused (plane, input-plane) rows -> single matmul per rotation in the kernel.
    w2 = weight.reshape(nOut * nIn, E)                               # free reshape

    # indices are 1-based scatter targets: output[..., fwd[l, k]] = input[..., l].
    # Precompute the per-rotation one-hot permutation matrices once (bf16 is exact
    # for 0/1):   onehot[k, l, m] = 1  iff  fwd[l, k] == m
    # so          out[i, k, j, m] = sum_l w[i, j, l] * onehot[k, l, m].
    fwd = indices.reshape(E, nRot).astype(jnp.int32) - 1             # fwd[l, k]
    onehot = (fwd.T[:, :, None] ==
              jnp.arange(E, dtype=jnp.int32)[None, None, :]).astype(jnp.bfloat16)

    # Host-side sanity check: each rotation's indices must be a permutation of 1..E
    # (the one-hot matmul sums duplicates; the original scatter overwrites).
    try:
        idx_np = np.asarray(indices).reshape(E, nRot)
    except Exception:
        idx_np = None   # traced indices: skip the host-side check
    if idx_np is not None:
        expect = np.arange(1, E + 1)
        for k in range(nRot):
            if not np.array_equal(np.sort(idx_np[:, k]), expect):
                raise ValueError(
                    f"indices[:, {k}] is not a permutation of 1..{E}; "
                    "MappingRotate requires a permutation per rotation.")

    kind = _device_kind()
    is_v7 = ("v7" in kind) or ("tpu7" in kind)
    max_bytes = (12 if is_v7 else 20) * 1024 * 1024       # v7x has 64 MiB VMEM
    vmem_limit = (48 if is_v7 else 64) * 1024 * 1024

    c = _pick_chunk(nOut, nIn, nRot, E, max_bytes)
    grid0 = nOut // c

    if is_v7 and grid0 >= 2 and grid0 % 2 == 0:
        sem0 = pltpu.CORE_PARALLEL       # actually split plane tiles across the 2 TCs
    else:
        sem0 = "parallel"

    out = pl.pallas_call(
        mapping_rotate_kernel,
        out_shape=jax.ShapeDtypeStruct((nOut, nRot, nIn, E), weight.dtype),
        grid_spec=pltpu.PrefetchScalarGridSpec(
            num_scalar_prefetch=0,
            grid=(grid0,),
            in_specs=[
                # c consecutive output planes, all input planes, fused rows
                pl.BlockSpec((c * nIn, E), lambda i: (i, 0)),
                # full one-hot stack, constant index map -> stays resident in VMEM
                pl.BlockSpec((nRot, E, E), lambda i: (0, 0, 0)),
            ],
            # write directly into the final (nOut, nRot, nIn, E) layout; the whole
            # rotation axis per tile -> large contiguous output DMAs
            out_specs=pl.BlockSpec((c, nRot, nIn, E), lambda i: (i, 0, 0, 0)),
        ),
        compiler_params=pltpu.CompilerParams(
            dimension_semantics=(sem0,),
            vmem_limit_bytes=vmem_limit),
    )(w2, onehot)

    # (nOut, nRot, nIn, E) -> (nOut*nRot, nIn*nOri, kH, kW): contiguous, free reshape.
    return out.reshape(nOut * nRot, nIn * nOri, kH, kW)


def mapping_rotate_ref(weight, indices):
    """Pure NumPy reference implementing the original scatter semantics."""
    weight = np.asarray(weight)
    indices = np.asarray(indices)
    nOut, nIn, nOri, kH, kW = weight.shape
    nRot = indices.shape[-1]
    E = nOri * kH * kW
    w = weight.reshape(nOut, nIn, E)
    fwd = indices.reshape(E, nRot).astype(np.int64) - 1
    out = np.zeros((nOut, nRot, nIn, E), weight.dtype)
    for l in range(E):
        for k in range(nRot):
            out[:, k, :, fwd[l, k]] = w[:, :, l]
    return out.reshape(nOut * nRot, nIn * nOri, kH, kW)


if __name__ == "__main__":
    # Small ARF configuration: 4 output planes, 2 input planes, 8 orientations,
    # 3x3 kernels, 8 rotations.
    nOut, nIn, nOri, kH, kW, nRot = 4, 2, 8, 3, 3, 8
    E = nOri * kH * kW

    key = jax.random.PRNGKey(0)
    k_w, k_idx = jax.random.split(key)

    # Deterministic ARF weight (the "input" of MappingRotate.forward).
    weight = jax.random.normal(k_w, (nOut, nIn, nOri, kH, kW), dtype=jnp.float32)

    # Deterministic rotation-mapping indices: one permutation of [1..E] per rotation,
    # laid out as [nOrientation, kH, kW, nRotation] (1-based, like ORN's indices).
    perms = jnp.stack(
        [jax.random.permutation(jax.random.fold_in(k_idx, k), E) + 1 for k in range(nRot)],
        axis=1,
    )  # [E, nRot]
    indices = perms.reshape(nOri, kH, kW, nRot).astype(jnp.int32)

    out = mapping_rotate(weight, indices)
    out = jax.block_until_ready(out)

    ref = mapping_rotate_ref(weight, indices)
    assert out.shape == (nOut * nRot, nIn * nOri, kH, kW), out.shape
    np.testing.assert_allclose(np.asarray(out), ref, rtol=0, atol=0)

    print("KERNEL_OK")
</pallas_src>

<mosaic_0001>
module attributes {stable_mosaic.version = 11 : i64} {
  func.func @mapping_rotate_kernel(%arg0: i32, %arg1: memref<8x72xf32, #tpu.memory_space<vmem>>, %arg2: memref<8x72x72xbf16, #tpu.memory_space<vmem>>, %arg3: memref<4x8x2x72xf32, #tpu.memory_space<vmem>>) attributes {dimension_semantics = [#tpu.dimension_semantics<parallel>], iteration_bounds = array<i64: 1>, scalar_prefetch = 0 : i64, scratch_operands = 0 : i64, tpu.core_type = #tpu.core_type<tc>, window_params = [{transform_indices = @transform_0, window_bounds = array<i64: 8, 72>}, {pipeline_mode = #tpu.pipeline_mode<synchronous>, transform_indices = @transform_1, window_bounds = array<i64: 8, 72, 72>}, {transform_indices = @transform_2, window_bounds = array<i64: 4, 8, 2, 72>}]} {
    %c0 = arith.constant 0 : index
    %c0_0 = arith.constant 0 : index
    %0 = vector.load %arg1[%c0, %c0_0] : memref<8x72xf32, #tpu.memory_space<vmem>>, vector<8x72xf32>
    %c0_1 = arith.constant 0 : index
    %c0_2 = arith.constant 0 : index
    %c0_3 = arith.constant 0 : index
    %1 = vector.load %arg2[%c0_1, %c0_2, %c0_3] : memref<8x72x72xbf16, #tpu.memory_space<vmem>>, vector<1x72x72xbf16>
    %2 = vector.shape_cast %1 : vector<1x72x72xbf16> to vector<72x72xbf16>
    %3 = arith.extf %2 : vector<72x72xbf16> to vector<72x72xf32>
    %cst = arith.constant dense<0.000000e+00> : vector<8x72xf32>
    %4 = tpu.matmul %0, %3, %cst {dimension_numbers = #tpu.dot_dimension_numbers<[1], [0], [0], [1], [0, 0, 1, 1], [], []>} : vector<8x72xf32>, vector<72x72xf32>, vector<8x72xf32> -> vector<8x72xf32>
    %5 = vector.extract_strided_slice %4 {offsets = [0, 0], sizes = [2, 72], strides = [1, 1]} : vector<8x72xf32> to vector<2x72xf32>
    %c0_4 = arith.constant 0 : index
    %c0_5 = arith.constant 0 : index
    %c0_6 = arith.constant 0 : index
    %c0_7 = arith.constant 0 : index
    %6 = vector.load %arg3[%c0_4, %c0_5, %c0_6, %c0_7] : memref<4x8x2x72xf32, #tpu.memory_space<vmem>>, vector<1x1x2x72xf32>
    %7 = vector.shape_cast %6 : vector<1x1x2x72xf32> to vector<2x72xf32>
    %8 = vector.shape_cast %5 : vector<2x72xf32> to vector<1x1x2x72xf32>
    tpu.vector_store %arg3[%c0_4, %c0_5, %c0_6, %c0_7], %8 {strides = array<i32>} : memref<4x8x2x72xf32, #tpu.memory_space<vmem>>, vector<1x1x2x72xf32>,
    %9 = vector.extract_strided_slice %4 {offsets = [2, 0], sizes = [2, 72], strides = [1, 1]} : vector<8x72xf32> to vector<2x72xf32>
    %c1 = arith.constant 1 : index
    %c0_8 = arith.constant 0 : index
    %c0_9 = arith.constant 0 : index
    %c0_10 = arith.constant 0 : index
    %10 = vector.load %arg3[%c1, %c0_8, %c0_9, %c0_10] : memref<4x8x2x72xf32, #tpu.memory_space<vmem>>, vector<1x1x2x72xf32>
    %11 = vector.shape_cast %10 : vector<1x1x2x72xf32> to vector<2x72xf32>
    %12 = vector.shape_cast %9 : vector<2x72xf32> to vector<1x1x2x72xf32>
    tpu.vector_store %arg3[%c1, %c0_8, %c0_9, %c0_10], %12 {strides = array<i32>} : memref<4x8x2x72xf32, #tpu.memory_space<vmem>>, vector<1x1x2x72xf32>,
    %13 = vector.extract_strided_slice %4 {offsets = [4, 0], sizes = [2, 72], strides = [1, 1]} : vector<8x72xf32> to vector<2x72xf32>
    %c2 = arith.constant 2 : index
    %c0_11 = arith.constant 0 : index
    %c0_12 = arith.constant 0 : index
    %c0_13 = arith.constant 0 : index
    %14 = vector.load %arg3[%c2, %c0_11, %c0_12, %c0_13] : memref<4x8x2x72xf32, #tpu.memory_space<vmem>>, vector<1x1x2x72xf32>
    %15 = vector.shape_cast %14 : vector<1x1x2x72xf32> to vector<2x72xf32>
    %16 = vector.shape_cast %13 : vector<2x72xf32> to vector<1x1x2x72xf32>
    tpu.vector_store %arg3[%c2, %c0_11, %c0_12, %c0_13], %16 {strides = array<i32>} : memref<4x8x2x72xf32, #tpu.memory_space<vmem>>, vector<1x1x2x72xf32>,
    %17 = vector.extract_strided_slice %4 {offsets = [6, 0], sizes = [2, 72], strides = [1, 1]} : vector<8x72xf32> to vector<2x72xf32>
    %c3 = arith.constant 3 : index
    %c0_14 = arith.constant 0 : index
    %c0_15 = arith.constant 0 : index
    %c0_16 = arith.constant 0 : index
    %18 = vector.load %arg3[%c3, %c0_14, %c0_15, %c0_16] : memref<4x8x2x72xf32, #tpu.memory_space<vmem>>, vector<1x1x2x72xf32>
    %19 = vector.shape_cast %18 : vector<1x1x2x72xf32> to vector<2x72xf32>
    %20 = vector.shape_cast %17 : vector<2x72xf32> to vector<1x1x2x72xf32>
    tpu.vector_store %arg3[%c3, %c0_14, %c0_15, %c0_16], %20 {strides = array<i32>} : memref<4x8x2x72xf32, #tpu.memory_space<vmem>>, vector<1x1x2x72xf32>,
    %c1_17 = arith.constant 1 : index
    %c0_18 = arith.constant 0 : index
    %c0_19 = arith.constant 0 : index
    %21 = vector.load %arg2[%c1_17, %c0_18, %c0_19] : memref<8x72x72xbf16, #tpu.memory_space<vmem>>, vector<1x72x72xbf16>
    %22 = vector.shape_cast %21 : vector<1x72x72xbf16> to vector<72x72xbf16>
    %23 = arith.extf %22 : vector<72x72xbf16> to vector<72x72xf32>
    %cst_20 = arith.constant dense<0.000000e+00> : vector<8x72xf32>
    %24 = tpu.matmul %0, %23, %cst_20 {dimension_numbers = #tpu.dot_dimension_numbers<[1], [0], [0], [1], [0, 0, 1, 1], [], []>} : vector<8x72xf32>, vector<72x72xf32>, vector<8x72xf32> -> vector<8x72xf32>
    %25 = vector.extract_strided_slice %24 {offsets = [0, 0], sizes = [2, 72], strides = [1, 1]} : vector<8x72xf32> to vector<2x72xf32>
    %c0_21 = arith.constant 0 : index
    %c1_22 = arith.constant 1 : index
    %c0_23 = arith.constant 0 : index
    %c0_24 = arith.constant 0 : index
    %26 = vector.load %arg3[%c0_21, %c1_22, %c0_23, %c0_24] : memref<4x8x2x72xf32, #tpu.memory_space<vmem>>, vector<1x1x2x72xf32>
    %27 = vector.shape_cast %26 : vector<1x1x2x72xf32> to vector<2x72xf32>
    %28 = vector.shape_cast %25 : vector<2x72xf32> to vector<1x1x2x72xf32>
    tpu.vector_store %arg3[%c0_21, %c1_22, %c0_23, %c0_24], %28 {strides = array<i32>} : memref<4x8x2x72xf32, #tpu.memory_space<vmem>>, vector<1x1x2x72xf32>,
    %29 = vector.extract_strided_slice %24 {offsets = [2, 0], sizes = [2, 72], strides = [1, 1]} : vector<8x72xf32> to vector<2x72xf32>
    %c1_25 = arith.constant 1 : index
    %c1_26 = arith.constant 1 : index
    %c0_27 = arith.constant 0 : index
    %c0_28 = arith.constant 0 : index
    %30 = vector.load %arg3[%c1_25, %c1_26, %c0_27, %c0_28] : memref<4x8x2x72xf32, #tpu.memory_space<vmem>>, vector<1x1x2x72xf32>
    %31 = vector.shape_cast %30 : vector<1x1x2x72xf32> to vector<2x72xf32>
    %32 = vector.shape_cast %29 : vector<2x72xf32> to vector<1x1x2x72xf32>
    tpu.vector_store %arg3[%c1_25, %c1_26, %c0_27, %c0_28], %32 {strides = array<i32>} : memref<4x8x2x72xf32, #tpu.memory_space<vmem>>, vector<1x1x2x72xf32>,
    %33 = vector.extract_strided_slice %24 {offsets = [4, 0], sizes = [2, 72], strides = [1, 1]} : vector<8x72xf32> to vector<2x72xf32>
    %c2_29 = arith.constant 2 : index
    %c1_30 = arith.constant 1 : index
    %c0_31 = arith.constant 0 : index
    %c0_32 = arith.constant 0 : index
    %34 = vector.load %arg3[%c2_29, %c1_30, %c0_31, %c0_32] : memref<4x8x2x72xf32, #tpu.memory_space<vmem>>, vector<1x1x2x72xf32>
    %35 = vector.shape_cast %34 : vector<1x1x2x72xf32> to vector<2x72xf32>
    %36 = vector.shape_cast %33 : vector<2x72xf32> to vector<1x1x2x72xf32>
    tpu.vector_store %arg3[%c2_29, %c1_30, %c0_31, %c0_32], %36 {strides = array<i32>} : memref<4x8x2x72xf32, #tpu.memory_space<vmem>>, vector<1x1x2x72xf32>,
    %37 = vector.extract_strided_slice %24 {offsets = [6, 0], sizes = [2, 72], strides = [1, 1]} : vector<8x72xf32> to vector<2x72xf32>
    %c3_33 = arith.constant 3 : index
    %c1_34 = arith.constant 1 : index
    %c0_35 = arith.constant 0 : index
    %c0_36 = arith.constant 0 : index
    %38 = vector.load %arg3[%c3_33, %c1_34, %c0_35, %c0_36] : memref<4x8x2x72xf32, #tpu.memory_space<vmem>>, vector<1x1x2x72xf32>
    %39 = vector.shape_cast %38 : vector<1x1x2x72xf32> to vector<2x72xf32>
    %40 = vector.shape_cast %37 : vector<2x72xf32> to vector<1x1x2x72xf32>
    tpu.vector_store %arg3[%c3_33, %c1_34, %c0_35, %c0_36], %40 {strides = array<i32>} : memref<4x8x2x72xf32, #tpu.memory_space<vmem>>, vector<1x1x2x72xf32>,
    %c2_37 = arith.constant 2 : index
    %c0_38 = arith.constant 0 : index
    %c0_39 = arith.constant 0 : index
    %41 = vector.load %arg2[%c2_37, %c0_38, %c0_39] : memref<8x72x72xbf16, #tpu.memory_space<vmem>>, vector<1x72x72xbf16>
    %42 = vector.shape_cast %41 : vector<1x72x72xbf16> to vector<72x72xbf16>
    %43 = arith.extf %42 : vector<72x72xbf16> to vector<72x72xf32>
    %cst_40 = arith.constant dense<0.000000e+00> : vector<8x72xf32>
    %44 = tpu.matmul %0, %43, %cst_40 {dimension_numbers = #tpu.dot_dimension_numbers<[1], [0], [0], [1], [0, 0, 1, 1], [], []>} : vector<8x72xf32>, vector<72x72xf32>, vector<8x72xf32> -> vector<8x72xf32>
    %45 = vector.extract_strided_slice %44 {offsets = [0, 0], sizes = [2, 72], strides = [1, 1]} : vector<8x72xf32> to vector<2x72xf32>
    %c0_41 = arith.constant 0 : index
    %c2_42 = arith.constant 2 : index
    %c0_43 = arith.constant 0 : index
    %c0_44 = arith.constant 0 : index
    %46 = vector.load %arg3[%c0_41, %c2_42, %c0_43, %c0_44] : memref<4x8x2x72xf32, #tpu.memory_space<vmem>>, vector<1x1x2x72xf32>
    %47 = vector.shape_cast %46 : vector<1x1x2x72xf32> to vector<2x72xf32>
    %48 = vector.shape_cast %45 : vector<2x72xf32> to vector<1x1x2x72xf32>
    tpu.vector_store %arg3[%c0_41, %c2_42, %c0_43, %c0_44], %48 {strides = array<i32>} : memref<4x8x2x72xf32, #tpu.memory_space<vmem>>, vector<1x1x2x72xf32>,
    %49 = vector.extract_strided_slice %44 {offsets = [2, 0], sizes = [2, 72], strides = [1, 1]} : vector<8x72xf32> to vector<2x72xf32>
    %c1_45 = arith.constant 1 : index
    %c2_46 = arith.constant 2 : index
    %c0_47 = arith.constant 0 : index
    %c0_48 = arith.constant 0 : index
    %50 = vector.load %arg3[%c1_45, %c2_46, %c0_47, %c0_48] : memref<4x8x2x72xf32, #tpu.memory_space<vmem>>, vector<1x1x2x72xf32>
    %51 = vector.shape_cast %50 : vector<1x1x2x72xf32> to vector<2x72xf32>
    %52 = vector.shape_cast %49 : vector<2x72xf32> to vector<1x1x2x72xf32>
    tpu.vector_store %arg3[%c1_45, %c2_46, %c0_47, %c0_48], %52 {strides = array<i32>} : memref<4x8x2x72xf32, #tpu.memory_space<vmem>>, vector<1x1x2x72xf32>,
    %53 = vector.extract_strided_slice %44 {offsets = [4, 0], sizes = [2, 72], strides = [1, 1]} : vector<8x72xf32> to vector<2x72xf32>
    %c2_49 = arith.constant 2 : index
    %c2_50 = arith.constant 2 : index
    %c0_51 = arith.constant 0 : index
    %c0_52 = arith.constant 0 : index
    %54 = vector.load %arg3[%c2_49, %c2_50, %c0_51, %c0_52] : memref<4x8x2x72xf32, #tpu.memory_space<vmem>>, vector<1x1x2x72xf32>
    %55 = vector.shape_cast %54 : vector<1x1x2x72xf32> to vector<2x72xf32>
    %56 = vector.shape_cast %53 : vector<2x72xf32> to vector<1x1x2x72xf32>
    tpu.vector_store %arg3[%c2_49, %c2_50, %c0_51, %c0_52], %56 {strides = array<i32>} : memref<4x8x2x72xf32, #tpu.memory_space<vmem>>, vector<1x1x2x72xf32>,
    %57 = vector.extract_strided_slice %44 {offsets = [6, 0], sizes = [2, 72], strides = [1, 1]} : vector<8x72xf32> to vector<2x72xf32>
    %c3_53 = arith.constant 3 : index
    %c2_54 = arith.constant 2 : index
    %c0_55 = arith.constant 0 : index
    %c0_56 = arith.constant 0 : index
    %58 = vector.load %arg3[%c3_53, %c2_54, %c0_55, %c0_56] : memref<4x8x2x72xf32, #tpu.memory_space<vmem>>, vector<1x1x2x72xf32>
    %59 = vector.shape_cast %58 : vector<1x1x2x72xf32> to vector<2x72xf32>
    %60 = vector.shape_cast %57 : vector<2x72xf32> to vector<1x1x2x72xf32>
    tpu.vector_store %arg3[%c3_53, %c2_54, %c0_55, %c0_56], %60 {strides = array<i32>} : memref<4x8x2x72xf32, #tpu.memory_space<vmem>>, vector<1x1x2x72xf32>,
    %c3_57 = arith.constant 3 : index
    %c0_58 = arith.constant 0 : index
    %c0_59 = arith.constant 0 : index
    %61 = vector.load %arg2[%c3_57, %c0_58, %c0_59] : memref<8x72x72xbf16, #tpu.memory_space<vmem>>, vector<1x72x72xbf16>
    %62 = vector.shape_cast %61 : vector<1x72x72xbf16> to vector<72x72xbf16>
    %63 = arith.extf %62 : vector<72x72xbf16> to vector<72x72xf32>
    %cst_60 = arith.constant dense<0.000000e+00> : vector<8x72xf32>
    %64 = tpu.matmul %0, %63, %cst_60 {dimension_numbers = #tpu.dot_dimension_numbers<[1], [0], [0], [1], [0, 0, 1, 1], [], []>} : vector<8x72xf32>, vector<72x72xf32>, vector<8x72xf32> -> vector<8x72xf32>
    %65 = vector.extract_strided_slice %64 {offsets = [0, 0], sizes = [2, 72], strides = [1, 1]} : vector<8x72xf32> to vector<2x72xf32>
    %c0_61 = arith.constant 0 : index
    %c3_62 = arith.constant 3 : index
    %c0_63 = arith.constant 0 : index
    %c0_64 = arith.constant 0 : index
    %66 = vector.load %arg3[%c0_61, %c3_62, %c0_63, %c0_64] : memref<4x8x2x72xf32, #tpu.memory_space<vmem>>, vector<1x1x2x72xf32>
    %67 = vector.shape_cast %66 : vector<1x1x2x72xf32> to vector<2x72xf32>
    %68 = vector.shape_cast %65 : vector<2x72xf32> to vector<1x1x2x72xf32>
    tpu.vector_store %arg3[%c0_61, %c3_62, %c0_63, %c0_64], %68 {strides = array<i32>} : memref<4x8x2x72xf32, #tpu.memory_space<vmem>>, vector<1x1x2x72xf32>,
    %69 = vector.extract_strided_slice %64 {offsets = [2, 0], sizes = [2, 72], strides = [1, 1]} : vector<8x72xf32> to vector<2x72xf32>
    %c1_65 = arith.constant 1 : index
    %c3_66 = arith.constant 3 : index
    %c0_67 = arith.constant 0 : index
    %c0_68 = arith.constant 0 : index
    %70 = vector.load %arg3[%c1_65, %c3_66, %c0_67, %c0_68] : memref<4x8x2x72xf32, #tpu.memory_space<vmem>>, vector<1x1x2x72xf32>
    %71 = vector.shape_cast %70 : vector<1x1x2x72xf32> to vector<2x72xf32>
    %72 = vector.shape_cast %69 : vector<2x72xf32> to vector<1x1x2x72xf32>
    tpu.vector_store %arg3[%c1_65, %c3_66, %c0_67, %c0_68], %72 {strides = array<i32>} : memref<4x8x2x72xf32, #tpu.memory_space<vmem>>, vector<1x1x2x72xf32>,
    %73 = vector.extract_strided_slice %64 {offsets = [4, 0], sizes = [2, 72], strides = [1, 1]} : vector<8x72xf32> to vector<2x72xf32>
    %c2_69 = arith.constant 2 : index
    %c3_70 = arith.constant 3 : index
    %c0_71 = arith.constant 0 : index
    %c0_72 = arith.constant 0 : index
    %74 = vector.load %arg3[%c2_69, %c3_70, %c0_71, %c0_72] : memref<4x8x2x72xf32, #tpu.memory_space<vmem>>, vector<1x1x2x72xf32>
    %75 = vector.shape_cast %74 : vector<1x1x2x72xf32> to vector<2x72xf32>
    %76 = vector.shape_cast %73 : vector<2x72xf32> to vector<1x1x2x72xf32>
    tpu.vector_store %arg3[%c2_69, %c3_70, %c0_71, %c0_72], %76 {strides = array<i32>} : memref<4x8x2x72xf32, #tpu.memory_space<vmem>>, vector<1x1x2x72xf32>,
    %77 = vector.extract_strided_slice %64 {offsets = [6, 0], sizes = [2, 72], strides = [1, 1]} : vector<8x72xf32> to vector<2x72xf32>
    %c3_73 = arith.constant 3 : index
    %c3_74 = arith.constant 3 : index
    %c0_75 = arith.constant 0 : index
    %c0_76 = arith.constant 0 : index
    %78 = vector.load %arg3[%c3_73, %c3_74, %c0_75, %c0_76] : memref<4x8x2x72xf32, #tpu.memory_space<vmem>>, vector<1x1x2x72xf32>
    %79 = vector.shape_cast %78 : vector<1x1x2x72xf32> to vector<2x72xf32>
    %80 = vector.shape_cast %77 : vector<2x72xf32> to vector<1x1x2x72xf32>
    tpu.vector_store %arg3[%c3_73, %c3_74, %c0_75, %c0_76], %80 {strides = array<i32>} : memref<4x8x2x72xf32, #tpu.memory_space<vmem>>, vector<1x1x2x72xf32>,
    %c4 = arith.constant 4 : index
    %c0_77 = arith.constant 0 : index
    %c0_78 = arith.constant 0 : index
    %81 = vector.load %arg2[%c4, %c0_77, %c0_78] : memref<8x72x72xbf16, #tpu.memory_space<vmem>>, vector<1x72x72xbf16>
    %82 = vector.shape_cast %81 : vector<1x72x72xbf16> to vector<72x72xbf16>
    %83 = arith.extf %82 : vector<72x72xbf16> to vector<72x72xf32>
    %cst_79 = arith.constant dense<0.000000e+00> : vector<8x72xf32>
    %84 = tpu.matmul %0, %83, %cst_79 {dimension_numbers = #tpu.dot_dimension_numbers<[1], [0], [0], [1], [0, 0, 1, 1], [], []>} : vector<8x72xf32>, vector<72x72xf32>, vector<8x72xf32> -> vector<8x72xf32>
    %85 = vector.extract_strided_slice %84 {offsets = [0, 0], sizes = [2, 72], strides = [1, 1]} : vector<8x72xf32> to vector<2x72xf32>
    %c0_80 = arith.constant 0 : index
    %c4_81 = arith.constant 4 : index
    %c0_82 = arith.constant 0 : index
    %c0_83 = arith.constant 0 : index
    %86 = vector.load %arg3[%c0_80, %c4_81, %c0_82, %c0_83] : memref<4x8x2x72xf32, #tpu.memory_space<vmem>>, vector<1x1x2x72xf32>
    %87 = vector.shape_cast %86 : vector<1x1x2x72xf32> to vector<2x72xf32>
    %88 = vector.shape_cast %85 : vector<2x72xf32> to vector<1x1x2x72xf32>
    tpu.vector_store %arg3[%c0_80, %c4_81, %c0_82, %c0_83], %88 {strides = array<i32>} : memref<4x8x2x72xf32, #tpu.memory_space<vmem>>, vector<1x1x2x72xf32>,
    %89 = vector.extract_strided_slice %84 {offsets = [2, 0], sizes = [2, 72], strides = [1, 1]} : vector<8x72xf32> to vector<2x72xf32>
    %c1_84 = arith.constant 1 : index
    %c4_85 = arith.constant 4 : index
    %c0_86 = arith.constant 0 : index
    %c0_87 = arith.constant 0 : index
    %90 = vector.load %arg3[%c1_84, %c4_85, %c0_86, %c0_87] : memref<4x8x2x72xf32, #tpu.memory_space<vmem>>, vector<1x1x2x72xf32>
    %91 = vector.shape_cast %90 : vector<1x1x2x72xf32> to vector<2x72xf32>
    %92 = vector.shape_cast %89 : vector<2x72xf32> to vector<1x1x2x72xf32>
    tpu.vector_store %arg3[%c1_84, %c4_85, %c0_86, %c0_87], %92 {strides = array<i32>} : memref<4x8x2x72xf32, #tpu.memory_space<vmem>>, vector<1x1x2x72xf32>,
    %93 = vector.extract_strided_slice %84 {offsets = [4, 0], sizes = [2, 72], strides = [1, 1]} : vector<8x72xf32> to vector<2x72xf32>
    %c2_88 = arith.constant 2 : index
    %c4_89 = arith.constant 4 : index
    %c0_90 = arith.constant 0 : index
    %c0_91 = arith.constant 0 : index
    %94 = vector.load %arg3[%c2_88, %c4_89, %c0_90, %c0_91] : memref<4x8x2x72xf32, #tpu.memory_space<vmem>>, vector<1x1x2x72xf32>
    %95 = vector.shape_cast %94 : vector<1x1x2x72xf32> to vector<2x72xf32>
    %96 = vector.shape_cast %93 : vector<2x72xf32> to vector<1x1x2x72xf32>
    tpu.vector_store %arg3[%c2_88, %c4_89, %c0_90, %c0_91], %96 {strides = array<i32>} : memref<4x8x2x72xf32, #tpu.memory_space<vmem>>, vector<1x1x2x72xf32>,
    %97 = vector.extract_strided_slice %84 {offsets = [6, 0], sizes = [2, 72], strides = [1, 1]} : vector<8x72xf32> to vector<2x72xf32>
    %c3_92 = arith.constant 3 : index
    %c4_93 = arith.constant 4 : index
    %c0_94 = arith.constant 0 : index
    %c0_95 = arith.constant 0 : index
    %98 = vector.load %arg3[%c3_92, %c4_93, %c0_94, %c0_95] : memref<4x8x2x72xf32, #tpu.memory_space<vmem>>, vector<1x1x2x72xf32>
    %99 = vector.shape_cast %98 : vector<1x1x2x72xf32> to vector<2x72xf32>
    %100 = vector.shape_cast %97 : vector<2x72xf32> to vector<1x1x2x72xf32>
    tpu.vector_store %arg3[%c3_92, %c4_93, %c0_94, %c0_95], %100 {strides = array<i32>} : memref<4x8x2x72xf32, #tpu.memory_space<vmem>>, vector<1x1x2x72xf32>,
    %c5 = arith.constant 5 : index
    %c0_96 = arith.constant 0 : index
    %c0_97 = arith.constant 0 : index
    %101 = vector.load %arg2[%c5, %c0_96, %c0_97] : memref<8x72x72xbf16, #tpu.memory_space<vmem>>, vector<1x72x72xbf16>
    %102 = vector.shape_cast %101 : vector<1x72x72xbf16> to vector<72x72xbf16>
    %103 = arith.extf %102 : vector<72x72xbf16> to vector<72x72xf32>
    %cst_98 = arith.constant dense<0.000000e+00> : vector<8x72xf32>
    %104 = tpu.matmul %0, %103, %cst_98 {dimension_numbers = #tpu.dot_dimension_numbers<[1], [0], [0], [1], [0, 0, 1, 1], [], []>} : vector<8x72xf32>, vector<72x72xf32>, vector<8x72xf32> -> vector<8x72xf32>
    %105 = vector.extract_strided_slice %104 {offsets = [0, 0], sizes = [2, 72], strides = [1, 1]} : vector<8x72xf32> to vector<2x72xf32>
    %c0_99 = arith.constant 0 : index
    %c5_100 = arith.constant 5 : index
    %c0_101 = arith.constant 0 : index
    %c0_102 = arith.constant 0 : index
    %106 = vector.load %arg3[%c0_99, %c5_100, %c0_101, %c0_102] : memref<4x8x2x72xf32, #tpu.memory_space<vmem>>, vector<1x1x2x72xf32>
    %107 = vector.shape_cast %106 : vector<1x1x2x72xf32> to vector<2x72xf32>
    %108 = vector.shape_cast %105 : vector<2x72xf32> to vector<1x1x2x72xf32>
    tpu.vector_store %arg3[%c0_99, %c5_100, %c0_101, %c0_102], %108 {strides = array<i32>} : memref<4x8x2x72xf32, #tpu.memory_space<vmem>>, vector<1x1x2x72xf32>,
    %109 = vector.extract_strided_slice %104 {offsets = [2, 0], sizes = [2, 72], strides = [1, 1]} : vector<8x72xf32> to vector<2x72xf32>
    %c1_103 = arith.constant 1 : index
    %c5_104 = arith.constant 5 : index
    %c0_105 = arith.constant 0 : index
    %c0_106 = arith.constant 0 : index
    %110 = vector.load %arg3[%c1_103, %c5_104, %c0_105, %c0_106] : memref<4x8x2x72xf32, #tpu.memory_space<vmem>>, vector<1x1x2x72xf32>
    %111 = vector.shape_cast %110 : vector<1x1x2x72xf32> to vector<2x72xf32>
    %112 = vector.shape_cast %109 : vector<2x72xf32> to vector<1x1x2x72xf32>
    tpu.vector_store %arg3[%c1_103, %c5_104, %c0_105, %c0_106], %112 {strides = array<i32>} : memref<4x8x2x72xf32, #tpu.memory_space<vmem>>, vector<1x1x2x72xf32>,
    %113 = vector.extract_strided_slice %104 {offsets = [4, 0], sizes = [2, 72], strides = [1, 1]} : vector<8x72xf32> to vector<2x72xf32>
    %c2_107 = arith.constant 2 : index
    %c5_108 = arith.constant 5 : index
    %c0_109 = arith.constant 0 : index
    %c0_110 = arith.constant 0 : index
    %114 = vector.load %arg3[%c2_107, %c5_108, %c0_109, %c0_110] : memref<4x8x2x72xf32, #tpu.memory_space<vmem>>, vector<1x1x2x72xf32>
    %115 = vector.shape_cast %114 : vector<1x1x2x72xf32> to vector<2x72xf32>
    %116 = vector.shape_cast %113 : vector<2x72xf32> to vector<1x1x2x72xf32>
    tpu.vector_store %arg3[%c2_107, %c5_108, %c0_109, %c0_110], %116 {strides = array<i32>} : memref<4x8x2x72xf32, #tpu.memory_space<vmem>>, vector<1x1x2x72xf32>,
    %117 = vector.extract_strided_slice %104 {offsets = [6, 0], sizes = [2, 72], strides = [1, 1]} : vector<8x72xf32> to vector<2x72xf32>
    %c3_111 = arith.constant 3 : index
    %c5_112 = arith.constant 5 : index
    %c0_113 = arith.constant 0 : index
    %c0_114 = arith.constant 0 : index
    %118 = vector.load %arg3[%c3_111, %c5_112, %c0_113, %c0_114] : memref<4x8x2x72xf32, #tpu.memory_space<vmem>>, vector<1x1x2x72xf32>
    %119 = vector.shape_cast %118 : vector<1x1x2x72xf32> to vector<2x72xf32>
    %120 = vector.shape_cast %117 : vector<2x72xf32> to vector<1x1x2x72xf32>
    tpu.vector_store %arg3[%c3_111, %c5_112, %c0_113, %c0_114], %120 {strides = array<i32>} : memref<4x8x2x72xf32, #tpu.memory_space<vmem>>, vector<1x1x2x72xf32>,
    %c6 = arith.constant 6 : index
    %c0_115 = arith.constant 0 : index
    %c0_116 = arith.constant 0 : index
    %121 = vector.load %arg2[%c6, %c0_115, %c0_116] : memref<8x72x72xbf16, #tpu.memory_space<vmem>>, vector<1x72x72xbf16>
    %122 = vector.shape_cast %121 : vector<1x72x72xbf16> to vector<72x72xbf16>
    %123 = arith.extf %122 : vector<72x72xbf16> to vector<72x72xf32>
    %cst_117 = arith.constant dense<0.000000e+00> : vector<8x72xf32>
    %124 = tpu.matmul %0, %123, %cst_117 {dimension_numbers = #tpu.dot_dimension_numbers<[1], [0], [0], [1], [0, 0, 1, 1], [], []>} : vector<8x72xf32>, vector<72x72xf32>, vector<8x72xf32> -> vector<8x72xf32>
    %125 = vector.extract_strided_slice %124 {offsets = [0, 0], sizes = [2, 72], strides = [1, 1]} : vector<8x72xf32> to vector<2x72xf32>
    %c0_118 = arith.constant 0 : index
    %c6_119 = arith.constant 6 : index
    %c0_120 = arith.constant 0 : index
    %c0_121 = arith.constant 0 : index
    %126 = vector.load %arg3[%c0_118, %c6_119, %c0_120, %c0_121] : memref<4x8x2x72xf32, #tpu.memory_space<vmem>>, vector<1x1x2x72xf32>
    %127 = vector.shape_cast %126 : vector<1x1x2x72xf32> to vector<2x72xf32>
    %128 = vector.shape_cast %125 : vector<2x72xf32> to vector<1x1x2x72xf32>
    tpu.vector_store %arg3[%c0_118, %c6_119, %c0_120, %c0_121], %128 {strides = array<i32>} : memref<4x8x2x72xf32, #tpu.memory_space<vmem>>, vector<1x1x2x72xf32>,
    %129 = vector.extract_strided_slice %124 {offsets = [2, 0], sizes = [2, 72], strides = [1, 1]} : vector<8x72xf32> to vector<2x72xf32>
    %c1_122 = arith.constant 1 : index
    %c6_123 = arith.constant 6 : index
    %c0_124 = arith.constant 0 : index
    %c0_125 = arith.constant 0 : index
    %130 = vector.load %arg3[%c1_122, %c6_123, %c0_124, %c0_125] : memref<4x8x2x72xf32, #tpu.memory_space<vmem>>, vector<1x1x2x72xf32>
    %131 = vector.shape_cast %130 : vector<1x1x2x72xf32> to vector<2x72xf32>
    %132 = vector.shape_cast %129 : vector<2x72xf32> to vector<1x1x2x72xf32>
    tpu.vector_store %arg3[%c1_122, %c6_123, %c0_124, %c0_125], %132 {strides = array<i32>} : memref<4x8x2x72xf32, #tpu.memory_space<vmem>>, vector<1x1x2x72xf32>,
    %133 = vector.extract_strided_slice %124 {offsets = [4, 0], sizes = [2, 72], strides = [1, 1]} : vector<8x72xf32> to vector<2x72xf32>
    %c2_126 = arith.constant 2 : index
    %c6_127 = arith.constant 6 : index
    %c0_128 = arith.constant 0 : index
    %c0_129 = arith.constant 0 : index
    %134 = vector.load %arg3[%c2_126, %c6_127, %c0_128, %c0_129] : memref<4x8x2x72xf32, #tpu.memory_space<vmem>>, vector<1x1x2x72xf32>
    %135 = vector.shape_cast %134 : vector<1x1x2x72xf32> to vector<2x72xf32>
    %136 = vector.shape_cast %133 : vector<2x72xf32> to vector<1x1x2x72xf32>
    tpu.vector_store %arg3[%c2_126, %c6_127, %c0_128, %c0_129], %136 {strides = array<i32>} : memref<4x8x2x72xf32, #tpu.memory_space<vmem>>, vector<1x1x2x72xf32>,
    %137 = vector.extract_strided_slice %124 {offsets = [6, 0], sizes = [2, 72], strides = [1, 1]} : vector<8x72xf32> to vector<2x72xf32>
    %c3_130 = arith.constant 3 : index
    %c6_131 = arith.constant 6 : index
    %c0_132 = arith.constant 0 : index
    %c0_133 = arith.constant 0 : index
    %138 = vector.load %arg3[%c3_130, %c6_131, %c0_132, %c0_133] : memref<4x8x2x72xf32, #tpu.memory_space<vmem>>, vector<1x1x2x72xf32>
    %139 = vector.shape_cast %138 : vector<1x1x2x72xf32> to vector<2x72xf32>
    %140 = vector.shape_cast %137 : vector<2x72xf32> to vector<1x1x2x72xf32>
    tpu.vector_store %arg3[%c3_130, %c6_131, %c0_132, %c0_133], %140 {strides = array<i32>} : memref<4x8x2x72xf32, #tpu.memory_space<vmem>>, vector<1x1x2x72xf32>,
    %c7 = arith.constant 7 : index
    %c0_134 = arith.constant 0 : index
    %c0_135 = arith.constant 0 : index
    %141 = vector.load %arg2[%c7, %c0_134, %c0_135] : memref<8x72x72xbf16, #tpu.memory_space<vmem>>, vector<1x72x72xbf16>
    %142 = vector.shape_cast %141 : vector<1x72x72xbf16> to vector<72x72xbf16>
    %143 = arith.extf %142 : vector<72x72xbf16> to vector<72x72xf32>
    %cst_136 = arith.constant dense<0.000000e+00> : vector<8x72xf32>
    %144 = tpu.matmul %0, %143, %cst_136 {dimension_numbers = #tpu.dot_dimension_numbers<[1], [0], [0], [1], [0, 0, 1, 1], [], []>} : vector<8x72xf32>, vector<72x72xf32>, vector<8x72xf32> -> vector<8x72xf32>
    %145 = vector.extract_strided_slice %144 {offsets = [0, 0], sizes = [2, 72], strides = [1, 1]} : vector<8x72xf32> to vector<2x72xf32>
    %c0_137 = arith.constant 0 : index
    %c7_138 = arith.constant 7 : index
    %c0_139 = arith.constant 0 : index
    %c0_140 = arith.constant 0 : index
    %146 = vector.load %arg3[%c0_137, %c7_138, %c0_139, %c0_140] : memref<4x8x2x72xf32, #tpu.memory_space<vmem>>, vector<1x1x2x72xf32>
    %147 = vector.shape_cast %146 : vector<1x1x2x72xf32> to vector<2x72xf32>
    %148 = vector.shape_cast %145 : vector<2x72xf32> to vector<1x1x2x72xf32>
    tpu.vector_store %arg3[%c0_137, %c7_138, %c0_139, %c0_140], %148 {strides = array<i32>} : memref<4x8x2x72xf32, #tpu.memory_space<vmem>>, vector<1x1x2x72xf32>,
    %149 = vector.extract_strided_slice %144 {offsets = [2, 0], sizes = [2, 72], strides = [1, 1]} : vector<8x72xf32> to vector<2x72xf32>
    %c1_141 = arith.constant 1 : index
    %c7_142 = arith.constant 7 : index
    %c0_143 = arith.constant 0 : index
    %c0_144 = arith.constant 0 : index
    %150 = vector.load %arg3[%c1_141, %c7_142, %c0_143, %c0_144] : memref<4x8x2x72xf32, #tpu.memory_space<vmem>>, vector<1x1x2x72xf32>
    %151 = vector.shape_cast %150 : vector<1x1x2x72xf32> to vector<2x72xf32>
    %152 = vector.shape_cast %149 : vector<2x72xf32> to vector<1x1x2x72xf32>
    tpu.vector_store %arg3[%c1_141, %c7_142, %c0_143, %c0_144], %152 {strides = array<i32>} : memref<4x8x2x72xf32, #tpu.memory_space<vmem>>, vector<1x1x2x72xf32>,
    %153 = vector.extract_strided_slice %144 {offsets = [4, 0], sizes = [2, 72], strides = [1, 1]} : vector<8x72xf32> to vector<2x72xf32>
    %c2_145 = arith.constant 2 : index
    %c7_146 = arith.constant 7 : index
    %c0_147 = arith.constant 0 : index
    %c0_148 = arith.constant 0 : index
    %154 = vector.load %arg3[%c2_145, %c7_146, %c0_147, %c0_148] : memref<4x8x2x72xf32, #tpu.memory_space<vmem>>, vector<1x1x2x72xf32>
    %155 = vector.shape_cast %154 : vector<1x1x2x72xf32> to vector<2x72xf32>
    %156 = vector.shape_cast %153 : vector<2x72xf32> to vector<1x1x2x72xf32>
    tpu.vector_store %arg3[%c2_145, %c7_146, %c0_147, %c0_148], %156 {strides = array<i32>} : memref<4x8x2x72xf32, #tpu.memory_space<vmem>>, vector<1x1x2x72xf32>,
    %157 = vector.extract_strided_slice %144 {offsets = [6, 0], sizes = [2, 72], strides = [1, 1]} : vector<8x72xf32> to vector<2x72xf32>
    %c3_149 = arith.constant 3 : index
    %c7_150 = arith.constant 7 : index
    %c0_151 = arith.constant 0 : index
    %c0_152 = arith.constant 0 : index
    %158 = vector.load %arg3[%c3_149, %c7_150, %c0_151, %c0_152] : memref<4x8x2x72xf32, #tpu.memory_space<vmem>>, vector<1x1x2x72xf32>
    %159 = vector.shape_cast %158 : vector<1x1x2x72xf32> to vector<2x72xf32>
    %160 = vector.shape_cast %157 : vector<2x72xf32> to vector<1x1x2x72xf32>
    tpu.vector_store %arg3[%c3_149, %c7_150, %c0_151, %c0_152], %160 {strides = array<i32>} : memref<4x8x2x72xf32, #tpu.memory_space<vmem>>, vector<1x1x2x72xf32>,
    return
  }
  func.func @transform_0(%arg0: i32) -> (i32, i32) {
    %c0_i32 = arith.constant 0 : i32
    %c0_i32_0 = arith.constant 0 : i32
    return %arg0, %c0_i32 : i32, i32
  }
  func.func @transform_1(%arg0: i32) -> (i32, i32, i32) {
    %c0_i32 = arith.constant 0 : i32
    %c0_i32_0 = arith.constant 0 : i32
    %c0_i32_1 = arith.constant 0 : i32
    %c0_i32_2 = arith.constant 0 : i32
    return %c0_i32, %c0_i32_0, %c0_i32_1 : i32, i32, i32
  }
  func.func @transform_2(%arg0: i32) -> (i32, i32, i32, i32) {
    %c0_i32 = arith.constant 0 : i32
    %c0_i32_0 = arith.constant 0 : i32
    %c0_i32_1 = arith.constant 0 : i32
    %c0_i32_2 = arith.constant 0 : i32
    return %arg0, %c0_i32, %c0_i32_0, %c0_i32_1 : i32, i32, i32, i32
  }
}

</mosaic_0001>

<llo_original>
// kernel: tpu_custom_call.1
$region0: #{tpu_custom_call.1}
  #allocation0 [shape = 'u32[]', space=smem, size = 0x4, offset = 0x4, fixed_abs, tag = 'smem constant byte address 0x4 - core index']
  #allocation1 [shape = 'u32[144,128]{1,0:T(1,128)}', space=vmem, size = 0x12000, scoped, tag = 'internal scratch']
  %s0 = inlined_call_operand.hbm [shape: f32[8,72], index: 0, kind: input, shape index: {}]
  %s1 = inlined_call_operand.hbm [shape: bf16[8,72,72], index: 1, kind: input, shape index: {}]
  %s2 = inlined_call_operand.hbm [shape: f32[4,8,2,72], index: 2, kind: output, shape index: {}]
  %s3 = sld [smem:[#allocation0]]
  $region26: #{tpu_custom_call.1} parent=0
    _
  %s5 = ssub.s32 1, %s3
  %s6 = scalar_select 0, %s5, %s3
  $region1: #{tpu_custom_call.1} parent=0
    #allocation2 [shape = 'u8[4096]{0}', space=vmem, size = 0x1000, scoped, tag = 'input window, operand 0, single buffered']
    #allocation3 [shape = 's32[1]{0}', space=sflag, size = 0x4, scoped, tag = 'scoped memory for tpu_custom_call.1']
    #allocation4 [shape = 's32[1]{0}', space=sflag, size = 0x4, scoped, tag = 'scoped memory for tpu_custom_call.1']
    #allocation5 [shape = 'u8[147456]{0}', space=vmem, size = 0x24000, scoped, tag = 'input window, operand 1, single buffered']
    #allocation6 [shape = 's32[1]{0}', space=sflag, size = 0x4, scoped, tag = 'scoped memory for tpu_custom_call.1']
    #allocation7 [shape = 'u8[32768]{0}', space=vmem, size = 0x8000, scoped, tag = 'output window, operand 0, single buffered']
    %7 = vsyncpa [#allocation3], 0
    %8 = vsyncpa [#allocation6], 0
    %9 = vsyncpa [#allocation4], 0
    // Predicated region
    $region2: #{tpu_custom_call.1} parent=1 // pred_check
      _
    $region3: #{tpu_custom_call.1} parent=1 // pred_check_branch
      %11 = sbr.rel (0) target = $region5
    $region4: #{tpu_custom_call.1} parent=1 // pred_region
      %s13 = ssub.s32 128, 128
      %14 = vsyncadd [#allocation3], %s13
      %s16 = sshll.u32 [#allocation2], 4
      %s17 = int_to_ptr.vmem [resolvable:$true] %s16
      %19 = dma.hbm_to_vmem [thread:$0]  %s0, 128, %s17, [#allocation3]
    $region5: #{tpu_custom_call.1} parent=1 // pred_fallthru
      _
    // Predicated region
    $region6: #{tpu_custom_call.1} parent=1 // pred_check
      _
    $region7: #{tpu_custom_call.1} parent=1 // pred_check_branch
      %21 = sbr.rel (0) target = $region9
    $region8: #{tpu_custom_call.1} parent=1 // pred_region
      %s23 = ssub.s32 4608, 4608
      %24 = vsyncadd [#allocation6], %s23
      %s25 = sshll.u32 [#allocation5], 4
      %s26 = int_to_ptr.vmem [resolvable:$true] %s25
      %31 = dma.hbm_to_vmem [thread:$0]  %s1, 4608, %s26, [#allocation6], 64, 64, 4
    $region9: #{tpu_custom_call.1} parent=1 // pred_fallthru
      _
    // Predicated region
    $region10: #{tpu_custom_call.1} parent=1 // pred_check
      _
    $region11: #{tpu_custom_call.1} parent=1 // pred_check_branch
      %33 = sbr.rel (0) target = $region13
    $region12: #{tpu_custom_call.1} parent=1 // pred_region
      %34 = dma.done [#allocation3], 128
    $region13: #{tpu_custom_call.1} parent=1 // pred_fallthru
      _
    // Predicated region
    $region14: #{tpu_custom_call.1} parent=1 // pred_check
      _
    $region15: #{tpu_custom_call.1} parent=1 // pred_check_branch
      %36 = sbr.rel (0) target = $region17
    $region16: #{tpu_custom_call.1} parent=1 // pred_region
      %37 = dma.done [#allocation6], 4608
    $region17: #{tpu_custom_call.1} parent=1 // pred_fallthru
      _
    %v38 = vld [vmem:[#allocation2] sm:$0xff]
    %v39 = vld [vmem:[#allocation5] sm:$0xf]
    %v40 = vld [vmem:[#allocation5 + $0x4] sm:$0xf]
    %v41 = vld [vmem:[#allocation5 + $0x8] sm:$0xf]
    %v42 = vld [vmem:[#allocation5 + $0xc] sm:$0xf]
    %v43 = vld [vmem:[#allocation5 + $0x10] sm:$0xf]
    %v44 = vld [vmem:[#allocation5 + $0x14] sm:$0xf]
    %v45 = vld [vmem:[#allocation5 + $0x18] sm:$0xf]
    %v46 = vld [vmem:[#allocation5 + $0x1c] sm:$0xf]
    %v47 = vld [vmem:[#allocation5 + $0x20] sm:$0xf]
    %v48 = vunpack.c.l.bf16 %v39
    %v49 = vunpack.c.l.bf16 %v40
    %v50 = vunpack.c.l.bf16 %v41
    %v51 = vunpack.c.l.bf16 %v42
    %v52 = vunpack.c.l.bf16 %v43
    %v53 = vunpack.c.l.bf16 %v44
    %v54 = vunpack.c.l.bf16 %v45
    %v55 = vunpack.c.l.bf16 %v46
    %v56 = vunpack.c.l.bf16 %v47
    %vm57 = vcmask 588800
    %v59 = vsel %vm57, %v38, 0
    %61 = vmatprep.subr.mxu0 0.0
    %62 = vmatpush1.msra.mxu0 %v48
    %63 = vmatprep.subr.mxu0 0.0
    %64 = vmatpush1.msra.mxu0 %v49
    %65 = vmatprep.subr.mxu0 0.0
    %66 = vmatpush1.msra.mxu0 %v50
    %67 = vmatprep.subr.mxu0 0.0
    %68 = vmatpush1.msra.mxu0 %v51
    %69 = vmatprep.subr.mxu0 0.0
    %70 = vmatpush1.msra.mxu0 %v52
    %71 = vmatprep.subr.mxu0 0.0
    %72 = vmatpush1.msra.mxu0 %v53
    %73 = vmatprep.subr.mxu0 0.0
    %74 = vmatpush1.msra.mxu0 %v54
    %75 = vmatprep.subr.mxu0 0.0
    %76 = vmatpush1.msra.mxu0 %v55
    %77 = vmatprep.subr.mxu0 0.0
    %78 = vmatpush1.msra.mxu0 %v56
    %79 = vmatprep.subr.mxu0 0.0
    %80 = vmatpush1.msra.mxu0 0.0
    %81 = vmatprep.subr.mxu0 0.0
    %82 = vmatpush1.msra.mxu0 0.0
    %83 = vmatprep.subr.mxu0 0.0
    %84 = vmatpush1.msra.mxu0 0.0
    %85 = vmatprep.subr.mxu0 0.0
    %86 = vmatpush1.msra.mxu0 0.0
    %87 = vmatprep.subr.mxu0 0.0
    %88 = vmatpush1.msra.mxu0 0.0
    %89 = vmatprep.subr.mxu0 0.0
    %90 = vmatpush1.msra.mxu0 0.0
    %91 = vmatprep.subr.mxu0 0.0
    %92 = vmatpush1.msra.mxu0 0.0
    %93 = vmatprep.subr.mxu0 0.0
    %94 = vmatpush1.msra.mxu0 0.0
    %95 = vmatprep.subr.mxu0 0.0
    %96 = vmatpush1.msra.mxu0 0.0
    %97 = vmatprep.subr.mxu0 0.0
    %98 = vmatpush1.msra.mxu0 0.0
    %99 = vmatprep.subr.mxu0 0.0
    %100 = vmatpush1.msra.mxu0 0.0
    %101 = vmatprep.subr.mxu0 0.0
    %102 = vmatpush1.msra.mxu0 0.0
    %103 = vmatprep.subr.mxu0 0.0
    %104 = vmatpush1.msra.mxu0 0.0
    %105 = vmatprep.subr.mxu0 0.0
    %106 = vmatpush1.msra.mxu0 0.0
    %107 = vmatprep.subr.mxu0 0.0
    %108 = vmatpush1.msra.mxu0 0.0
    %109 = vmatprep.subr.mxu0 0.0
    %110 = vmatpush1.msra.mxu0 0.0
    %111 = vmatprep.subr.mxu0 0.0
    %112 = vmatpush1.msra.mxu0 0.0
    %113 = vmatprep.subr.mxu0 0.0
    %114 = vmatpush1.msra.mxu0 0.0
    %115 = vmatprep.subr.mxu0 0.0
    %116 = vmatpush1.msra.mxu0 0.0
    %117 = vmatprep.subr.mxu0 0.0
    %118 = vmatpush1.msra.mxu0 0.0
    %119 = vmatprep.subr.mxu0 0.0
    %120 = vmatpush1.msra.mxu0 0.0
    %121 = vmatprep.subr.mxu0 0.0
    %122 = vmatpush1.msra.mxu0 0.0
    %123 = vmatprep.subr.mxu0 0.0
    %124 = vmatpush1.msra.mxu0 0.0
    %125 = vmatprep.mubr.f32.mxu0 0.0
    %126 = vmatmul.mubr.f32.gmra.mrb[0].mxu0 %v59
    %v127 = vpop.f32.mrb[0].mxu0
    %v128 = vadd.f32 0.0, %v127
    %v129 = vpop.f32.mrb[0].mxu0
    %130 = vdwg.mxu0
    %vm131 = vcmask 582656
    %132 = vst.msk [vmem:[#allocation7] sm:$0x3] %vm131, %v128
    %s133 = scalar_lea.vmem [#allocation7], 16
    %vm134 = vcmask 584706
    %135 = vst.msk [vmem:[%s133 - $0x2] sm:$0xc] %vm134, %v128
    %s136 = scalar_lea.vmem [#allocation7], 32
    %vm137 = vcmask 586756
    %138 = vst.msk [vmem:[%s136 - $0x4] sm:$0x30] %vm137, %v128
    %s139 = scalar_lea.vmem [#allocation7], 48
    %vm140 = vcmask 588806
    %141 = vst.msk [vmem:[%s139 - $0x6] sm:$0xc0] %vm140, %v128
    %s142 = scalar_lea.vmem [#allocation5], 36
    %v143 = vld [vmem:[%s142] sm:$0xf]
    %v144 = vld [vmem:[%s142 + $0x4] sm:$0xf]
    %v145 = vld [vmem:[%s142 + $0x8] sm:$0xf]
    %v146 = vld [vmem:[%s142 + $0xc] sm:$0xf]
    %v147 = vld [vmem:[%s142 + $0x10] sm:$0xf]
    %v148 = vld [vmem:[%s142 + $0x14] sm:$0xf]
    %v149 = vld [vmem:[%s142 + $0x18] sm:$0xf]
    %v150 = vld [vmem:[%s142 + $0x1c] sm:$0xf]
    %v151 = vld [vmem:[%s142 + $0x20] sm:$0xf]
    %v152 = vunpack.c.l.bf16 %v143
    %v153 = vunpack.c.l.bf16 %v144
    %v154 = vunpack.c.l.bf16 %v145
    %v155 = vunpack.c.l.bf16 %v146
    %v156 = vunpack.c.l.bf16 %v147
    %v157 = vunpack.c.l.bf16 %v148
    %v158 = vunpack.c.l.bf16 %v149
    %v159 = vunpack.c.l.bf16 %v150
    %v160 = vunpack.c.l.bf16 %v151
    %161 = vmatprep.subr.mxu0 0.0
    %162 = vmatpush1.msra.mxu0 %v152
    %163 = vmatprep.subr.mxu0 0.0
    %164 = vmatpush1.msra.mxu0 %v153
    %165 = vmatprep.subr.mxu0 0.0
    %166 = vmatpush1.msra.mxu0 %v154
    %167 = vmatprep.subr.mxu0 0.0
    %168 = vmatpush1.msra.mxu0 %v155
    %169 = vmatprep.subr.mxu0 0.0
    %170 = vmatpush1.msra.mxu0 %v156
    %171 = vmatprep.subr.mxu0 0.0
    %172 = vmatpush1.msra.mxu0 %v157
    %173 = vmatprep.subr.mxu0 0.0
    %174 = vmatpush1.msra.mxu0 %v158
    %175 = vmatprep.subr.mxu0 0.0
    %176 = vmatpush1.msra.mxu0 %v159
    %177 = vmatprep.subr.mxu0 0.0
    %178 = vmatpush1.msra.mxu0 %v160
    %179 = vmatprep.subr.mxu0 0.0
    %180 = vmatpush1.msra.mxu0 0.0
    %181 = vmatprep.subr.mxu0 0.0
    %182 = vmatpush1.msra.mxu0 0.0
    %183 = vmatprep.subr.mxu0 0.0
    %184 = vmatpush1.msra.mxu0 0.0
    %185 = vmatprep.subr.mxu0 0.0
    %186 = vmatpush1.msra.mxu0 0.0
    %187 = vmatprep.subr.mxu0 0.0
    %188 = vmatpush1.msra.mxu0 0.0
    %189 = vmatprep.subr.mxu0 0.0
    %190 = vmatpush1.msra.mxu0 0.0
    %191 = vmatprep.subr.mxu0 0.0
    %192 = vmatpush1.msra.mxu0 0.0
    %193 = vmatprep.subr.mxu0 0.0
    %194 = vmatpush1.msra.mxu0 0.0
    %195 = vmatprep.subr.mxu0 0.0
    %196 = vmatpush1.msra.mxu0 0.0
    %197 = vmatprep.subr.mxu0 0.0
    %198 = vmatpush1.msra.mxu0 0.0
    %199 = vmatprep.subr.mxu0 0.0
    %200 = vmatpush1.msra.mxu0 0.0
    %201 = vmatprep.subr.mxu0 0.0
    %202 = vmatpush1.msra.mxu0 0.0
    %203 = vmatprep.subr.mxu0 0.0
    %204 = vmatpush1.msra.mxu0 0.0
    %205 = vmatprep.subr.mxu0 0.0
    %206 = vmatpush1.msra.mxu0 0.0
    %207 = vmatprep.subr.mxu0 0.0
    %208 = vmatpush1.msra.mxu0 0.0
    %209 = vmatprep.subr.mxu0 0.0
    %210 = vmatpush1.msra.mxu0 0.0
    %211 = vmatprep.subr.mxu0 0.0
    %212 = vmatpush1.msra.mxu0 0.0
    %213 = vmatprep.subr.mxu0 0.0
    %214 = vmatpush1.msra.mxu0 0.0
    %215 = vmatprep.subr.mxu0 0.0
    %216 = vmatpush1.msra.mxu0 0.0
    %217 = vmatprep.subr.mxu0 0.0
    %218 = vmatpush1.msra.mxu0 0.0
    %219 = vmatprep.subr.mxu0 0.0
    %220 = vmatpush1.msra.mxu0 0.0
    %221 = vmatprep.subr.mxu0 0.0
    %222 = vmatpush1.msra.mxu0 0.0
    %223 = vmatprep.subr.mxu0 0.0
    %224 = vmatpush1.msra.mxu0 0.0
    %225 = vmatprep.mubr.f32.mxu0 0.0
    %226 = vmatmul.mubr.f32.gmra.mrb[0].mxu0 %v59
    %v227 = vpop.f32.mrb[0].mxu0
    %v228 = vadd.f32 0.0, %v227
    %v229 = vpop.f32.mrb[0].mxu0
    %230 = vdwg.mxu0
    %s231 = scalar_lea.vmem [#allocation7], 2
    %232 = vst.msk [vmem:[%s231] sm:$0x3] %vm131, %v228
    %s233 = scalar_lea.vmem [#allocation7], 18
    %234 = vst.msk [vmem:[%s233 - $0x2] sm:$0xc] %vm134, %v228
    %s235 = scalar_lea.vmem [#allocation7], 34
    %236 = vst.msk [vmem:[%s235 - $0x4] sm:$0x30] %vm137, %v228
    %s237 = scalar_lea.vmem [#allocation7], 50
    %238 = vst.msk [vmem:[%s237 - $0x6] sm:$0xc0] %vm140, %v228
    %s239 = scalar_lea.vmem [#allocation5], 72
    %v240 = vld [vmem:[%s239] sm:$0xf]
    %v241 = vld [vmem:[%s239 + $0x4] sm:$0xf]
    %v242 = vld [vmem:[%s239 + $0x8] sm:$0xf]
    %v243 = vld [vmem:[%s239 + $0xc] sm:$0xf]
    %v244 = vld [vmem:[%s239 + $0x10] sm:$0xf]
    %v245 = vld [vmem:[%s239 + $0x14] sm:$0xf]
    %v246 = vld [vmem:[%s239 + $0x18] sm:$0xf]
    %v247 = vld [vmem:[%s239 + $0x1c] sm:$0xf]
    %v248 = vld [vmem:[%s239 + $0x20] sm:$0xf]
    %v249 = vunpack.c.l.bf16 %v240
    %v250 = vunpack.c.l.bf16 %v241
    %v251 = vunpack.c.l.bf16 %v242
    %v252 = vunpack.c.l.bf16 %v243
    %v253 = vunpack.c.l.bf16 %v244
    %v254 = vunpack.c.l.bf16 %v245
    %v255 = vunpack.c.l.bf16 %v246
    %v256 = vunpack.c.l.bf16 %v247
    %v257 = vunpack.c.l.bf16 %v248
    %258 = vmatprep.subr.mxu0 0.0
    %259 = vmatpush1.msra.mxu0 %v249
    %260 = vmatprep.subr.mxu0 0.0
    %261 = vmatpush1.msra.mxu0 %v250
    %262 = vmatprep.subr.mxu0 0.0
    %263 = vmatpush1.msra.mxu0 %v251
    %264 = vmatprep.subr.mxu0 0.0
    %265 = vmatpush1.msra.mxu0 %v252
    %266 = vmatprep.subr.mxu0 0.0
    %267 = vmatpush1.msra.mxu0 %v253
    %268 = vmatprep.subr.mxu0 0.0
    %269 = vmatpush1.msra.mxu0 %v254
    %270 = vmatprep.subr.mxu0 0.0
    %271 = vmatpush1.msra.mxu0 %v255
    %272 = vmatprep.subr.mxu0 0.0
    %273 = vmatpush1.msra.mxu0 %v256
    %274 = vmatprep.subr.mxu0 0.0
    %275 = vmatpush1.msra.mxu0 %v257
    %276 = vmatprep.subr.mxu0 0.0
    %277 = vmatpush1.msra.mxu0 0.0
    %278 = vmatprep.subr.mxu0 0.0
    %279 = vmatpush1.msra.mxu0 0.0
    %280 = vmatprep.subr.mxu0 0.0
    %281 = vmatpush1.msra.mxu0 0.0
    %282 = vmatprep.subr.mxu0 0.0
    %283 = vmatpush1.msra.mxu0 0.0
    %284 = vmatprep.subr.mxu0 0.0
    %285 = vmatpush1.msra.mxu0 0.0
    %286 = vmatprep.subr.mxu0 0.0
    %287 = vmatpush1.msra.mxu0 0.0
    %288 = vmatprep.subr.mxu0 0.0
    %289 = vmatpush1.msra.mxu0 0.0
    %290 = vmatprep.subr.mxu0 0.0
    %291 = vmatpush1.msra.mxu0 0.0
    %292 = vmatprep.subr.mxu0 0.0
    %293 = vmatpush1.msra.mxu0 0.0
    %294 = vmatprep.subr.mxu0 0.0
    %295 = vmatpush1.msra.mxu0 0.0
    %296 = vmatprep.subr.mxu0 0.0
    %297 = vmatpush1.msra.mxu0 0.0
    %298 = vmatprep.subr.mxu0 0.0
    %299 = vmatpush1.msra.mxu0 0.0
    %300 = vmatprep.subr.mxu0 0.0
    %301 = vmatpush1.msra.mxu0 0.0
    %302 = vmatprep.subr.mxu0 0.0
    %303 = vmatpush1.msra.mxu0 0.0
    %304 = vmatprep.subr.mxu0 0.0
    %305 = vmatpush1.msra.mxu0 0.0
    %306 = vmatprep.subr.mxu0 0.0
    %307 = vmatpush1.msra.mxu0 0.0
    %308 = vmatprep.subr.mxu0 0.0
    %309 = vmatpush1.msra.mxu0 0.0
    %310 = vmatprep.subr.mxu0 0.0
    %311 = vmatpush1.msra.mxu0 0.0
    %312 = vmatprep.subr.mxu0 0.0
    %313 = vmatpush1.msra.mxu0 0.0
    %314 = vmatprep.subr.mxu0 0.0
    %315 = vmatpush1.msra.mxu0 0.0
    %316 = vmatprep.subr.mxu0 0.0
    %317 = vmatpush1.msra.mxu0 0.0
    %318 = vmatprep.subr.mxu0 0.0
    %319 = vmatpush1.msra.mxu0 0.0
    %320 = vmatprep.subr.mxu0 0.0
    %321 = vmatpush1.msra.mxu0 0.0
    %322 = vmatprep.mubr.f32.mxu0 0.0
    %323 = vmatmul.mubr.f32.gmra.mrb[0].mxu0 %v59
    %v324 = vpop.f32.mrb[0].mxu0
    %v325 = vadd.f32 0.0, %v324
    %v326 = vpop.f32.mrb[0].mxu0
    %327 = vdwg.mxu0
    %s328 = scalar_lea.vmem [#allocation7], 4
    %329 = vst.msk [vmem:[%s328] sm:$0x3] %vm131, %v325
    %s330 = scalar_lea.vmem [#allocation7], 20
    %331 = vst.msk [vmem:[%s330 - $0x2] sm:$0xc] %vm134, %v325
    %s332 = scalar_lea.vmem [#allocation7], 36
    %333 = vst.msk [vmem:[%s332 - $0x4] sm:$0x30] %vm137, %v325
    %s334 = scalar_lea.vmem [#allocation7], 52
    %335 = vst.msk [vmem:[%s334 - $0x6] sm:$0xc0] %vm140, %v325
    %s336 = scalar_lea.vmem [#allocation5], 108
    %v337 = vld [vmem:[%s336] sm:$0xf]
    %v338 = vld [vmem:[%s336 + $0x4] sm:$0xf]
    %v339 = vld [vmem:[%s336 + $0x8] sm:$0xf]
    %v340 = vld [vmem:[%s336 + $0xc] sm:$0xf]
    %v341 = vld [vmem:[%s336 + $0x10] sm:$0xf]
    %v342 = vld [vmem:[%s336 + $0x14] sm:$0xf]
    %v343 = vld [vmem:[%s336 + $0x18] sm:$0xf]
    %v344 = vld [vmem:[%s336 + $0x1c] sm:$0xf]
    %v345 = vld [vmem:[%s336 + $0x20] sm:$0xf]
    %v346 = vunpack.c.l.bf16 %v337
    %v347 = vunpack.c.l.bf16 %v338
    %v348 = vunpack.c.l.bf16 %v339
    %v349 = vunpack.c.l.bf16 %v340
    %v350 = vunpack.c.l.bf16 %v341
    %v351 = vunpack.c.l.bf16 %v342
    %v352 = vunpack.c.l.bf16 %v343
    %v353 = vunpack.c.l.bf16 %v344
    %v354 = vunpack.c.l.bf16 %v345
    %355 = vmatprep.subr.mxu0 0.0
    %356 = vmatpush1.msra.mxu0 %v346
    %357 = vmatprep.subr.mxu0 0.0
    %358 = vmatpush1.msra.mxu0 %v347
    %359 = vmatprep.subr.mxu0 0.0
    %360 = vmatpush1.msra.mxu0 %v348
    %361 = vmatprep.subr.mxu0 0.0
    %362 = vmatpush1.msra.mxu0 %v349
    %363 = vmatprep.subr.mxu0 0.0
    %364 = vmatpush1.msra.mxu0 %v350
    %365 = vmatprep.subr.mxu0 0.0
    %366 = vmatpush1.msra.mxu0 %v351
    %367 = vmatprep.subr.mxu0 0.0
    %368 = vmatpush1.msra.mxu0 %v352
    %369 = vmatprep.subr.mxu0 0.0
    %370 = vmatpush1.msra.mxu0 %v353
    %371 = vmatprep.subr.mxu0 0.0
    %372 = vmatpush1.msra.mxu0 %v354
    %373 = vmatprep.subr.mxu0 0.0
    %374 = vmatpush1.msra.mxu0 0.0
    %375 = vmatprep.subr.mxu0 0.0
    %376 = vmatpush1.msra.mxu0 0.0
    %377 = vmatprep.subr.mxu0 0.0
    %378 = vmatpush1.msra.mxu0 0.0
    %379 = vmatprep.subr.mxu0 0.0
    %380 = vmatpush1.msra.mxu0 0.0
    %381 = vmatprep.subr.mxu0 0.0
    %382 = vmatpush1.msra.mxu0 0.0
    %383 = vmatprep.subr.mxu0 0.0
    %384 = vmatpush1.msra.mxu0 0.0
    %385 = vmatprep.subr.mxu0 0.0
    %386 = vmatpush1.msra.mxu0 0.0
    %387 = vmatprep.subr.mxu0 0.0
    %388 = vmatpush1.msra.mxu0 0.0
    %389 = vmatprep.subr.mxu0 0.0
    %390 = vmatpush1.msra.mxu0 0.0
    %391 = vmatprep.subr.mxu0 0.0
    %392 = vmatpush1.msra.mxu0 0.0
    %393 = vmatprep.subr.mxu0 0.0
    %394 = vmatpush1.msra.mxu0 0.0
    %395 = vmatprep.subr.mxu0 0.0
    %396 = vmatpush1.msra.mxu0 0.0
    %397 = vmatprep.subr.mxu0 0.0
    %398 = vmatpush1.msra.mxu0 0.0
    %399 = vmatprep.subr.mxu0 0.0
    %400 = vmatpush1.msra.mxu0 0.0
    %401 = vmatprep.subr.mxu0 0.0
    %402 = vmatpush1.msra.mxu0 0.0
    %403 = vmatprep.subr.mxu0 0.0
    %404 = vmatpush1.msra.mxu0 0.0
    %405 = vmatprep.subr.mxu0 0.0
    %406 = vmatpush1.msra.mxu0 0.0
    %407 = vmatprep.subr.mxu0 0.0
    %408 = vmatpush1.msra.mxu0 0.0
    %409 = vmatprep.subr.mxu0 0.0
    %410 = vmatpush1.msra.mxu0 0.0
    %411 = vmatprep.subr.mxu0 0.0
    %412 = vmatpush1.msra.mxu0 0.0
    %413 = vmatprep.subr.mxu0 0.0
    %414 = vmatpush1.msra.mxu0 0.0
    %415 = vmatprep.subr.mxu0 0.0
    %416 = vmatpush1.msra.mxu0 0.0
    %417 = vmatprep.subr.mxu0 0.0
    %418 = vmatpush1.msra.mxu0 0.0
    %419 = vmatprep.mubr.f32.mxu0 0.0
    %420 = vmatmul.mubr.f32.gmra.mrb[0].mxu0 %v59
    %v421 = vpop.f32.mrb[0].mxu0
    %v422 = vadd.f32 0.0, %v421
    %v423 = vpop.f32.mrb[0].mxu0
    %424 = vdwg.mxu0
    %s425 = scalar_lea.vmem [#allocation7], 6
    %426 = vst.msk [vmem:[%s425] sm:$0x3] %vm131, %v422
    %s427 = scalar_lea.vmem [#allocation7], 22
    %428 = vst.msk [vmem:[%s427 - $0x2] sm:$0xc] %vm134, %v422
    %s429 = scalar_lea.vmem [#allocation7], 38
    %430 = vst.msk [vmem:[%s429 - $0x4] sm:$0x30] %vm137, %v422
    %s431 = scalar_lea.vmem [#allocation7], 54
    %432 = vst.msk [vmem:[%s431 - $0x6] sm:$0xc0] %vm140, %v422
    %s433 = scalar_lea.vmem [#allocation5], 144
    %v434 = vld [vmem:[%s433] sm:$0xf]
    %v435 = vld [vmem:[%s433 + $0x4] sm:$0xf]
    %v436 = vld [vmem:[%s433 + $0x8] sm:$0xf]
    %v437 = vld [vmem:[%s433 + $0xc] sm:$0xf]
    %v438 = vld [vmem:[%s433 + $0x10] sm:$0xf]
    %v439 = vld [vmem:[%s433 + $0x14] sm:$0xf]
    %v440 = vld [vmem:[%s433 + $0x18] sm:$0xf]
    %v441 = vld [vmem:[%s433 + $0x1c] sm:$0xf]
    %v442 = vld [vmem:[%s433 + $0x20] sm:$0xf]
    %v443 = vunpack.c.l.bf16 %v434
    %v444 = vunpack.c.l.bf16 %v435
    %v445 = vunpack.c.l.bf16 %v436
    %v446 = vunpack.c.l.bf16 %v437
    %v447 = vunpack.c.l.bf16 %v438
    %v448 = vunpack.c.l.bf16 %v439
    %v449 = vunpack.c.l.bf16 %v440
    %v450 = vunpack.c.l.bf16 %v441
    %v451 = vunpack.c.l.bf16 %v442
    %452 = vmatprep.subr.mxu0 0.0
    %453 = vmatpush1.msra.mxu0 %v443
    %454 = vmatprep.subr.mxu0 0.0
    %455 = vmatpush1.msra.mxu0 %v444
    %456 = vmatprep.subr.mxu0 0.0
    %457 = vmatpush1.msra.mxu0 %v445
    %458 = vmatprep.subr.mxu0 0.0
    %459 = vmatpush1.msra.mxu0 %v446
    %460 = vmatprep.subr.mxu0 0.0
    %461 = vmatpush1.msra.mxu0 %v447
    %462 = vmatprep.subr.mxu0 0.0
    %463 = vmatpush1.msra.mxu0 %v448
    %464 = vmatprep.subr.mxu0 0.0
    %465 = vmatpush1.msra.mxu0 %v449
    %466 = vmatprep.subr.mxu0 0.0
    %467 = vmatpush1.msra.mxu0 %v450
    %468 = vmatprep.subr.mxu0 0.0
    %469 = vmatpush1.msra.mxu0 %v451
    %470 = vmatprep.subr.mxu0 0.0
    %471 = vmatpush1.msra.mxu0 0.0
    %472 = vmatprep.subr.mxu0 0.0
    %473 = vmatpush1.msra.mxu0 0.0
    %474 = vmatprep.subr.mxu0 0.0
    %475 = vmatpush1.msra.mxu0 0.0
    %476 = vmatprep.subr.mxu0 0.0
    %477 = vmatpush1.msra.mxu0 0.0
    %478 = vmatprep.subr.mxu0 0.0
    %479 = vmatpush1.msra.mxu0 0.0
    %480 = vmatprep.subr.mxu0 0.0
    %481 = vmatpush1.msra.mxu0 0.0
    %482 = vmatprep.subr.mxu0 0.0
    %483 = vmatpush1.msra.mxu0 0.0
    %484 = vmatprep.subr.mxu0 0.0
    %485 = vmatpush1.msra.mxu0 0.0
    %486 = vmatprep.subr.mxu0 0.0
    %487 = vmatpush1.msra.mxu0 0.0
    %488 = vmatprep.subr.mxu0 0.0
    %489 = vmatpush1.msra.mxu0 0.0
    %490 = vmatprep.subr.mxu0 0.0
    %491 = vmatpush1.msra.mxu0 0.0
    %492 = vmatprep.subr.mxu0 0.0
    %493 = vmatpush1.msra.mxu0 0.0
    %494 = vmatprep.subr.mxu0 0.0
    %495 = vmatpush1.msra.mxu0 0.0
    %496 = vmatprep.subr.mxu0 0.0
    %497 = vmatpush1.msra.mxu0 0.0
    %498 = vmatprep.subr.mxu0 0.0
    %499 = vmatpush1.msra.mxu0 0.0
    %500 = vmatprep.subr.mxu0 0.0
    %501 = vmatpush1.msra.mxu0 0.0
    %502 = vmatprep.subr.mxu0 0.0
    %503 = vmatpush1.msra.mxu0 0.0
    %504 = vmatprep.subr.mxu0 0.0
    %505 = vmatpush1.msra.mxu0 0.0
    %506 = vmatprep.subr.mxu0 0.0
    %507 = vmatpush1.msra.mxu0 0.0
    %508 = vmatprep.subr.mxu0 0.0
    %509 = vmatpush1.msra.mxu0 0.0
    %510 = vmatprep.subr.mxu0 0.0
    %511 = vmatpush1.msra.mxu0 0.0
    %512 = vmatprep.subr.mxu0 0.0
    %513 = vmatpush1.msra.mxu0 0.0
    %514 = vmatprep.subr.mxu0 0.0
    %515 = vmatpush1.msra.mxu0 0.0
    %516 = vmatprep.mubr.f32.mxu0 0.0
    %517 = vmatmul.mubr.f32.gmra.mrb[0].mxu0 %v59
    %v518 = vpop.f32.mrb[0].mxu0
    %v519 = vadd.f32 0.0, %v518
    %v520 = vpop.f32.mrb[0].mxu0
    %521 = vdwg.mxu0
    %s522 = scalar_lea.vmem [#allocation7], 8
    %523 = vst.msk [vmem:[%s522] sm:$0x3] %vm131, %v519
    %s524 = scalar_lea.vmem [#allocation7], 24
    %525 = vst.msk [vmem:[%s524 - $0x2] sm:$0xc] %vm134, %v519
    %s526 = scalar_lea.vmem [#allocation7], 40
    %527 = vst.msk [vmem:[%s526 - $0x4] sm:$0x30] %vm137, %v519
    %s528 = scalar_lea.vmem [#allocation7], 56
    %529 = vst.msk [vmem:[%s528 - $0x6] sm:$0xc0] %vm140, %v519
    %s530 = scalar_lea.vmem [#allocation5], 180
    %v531 = vld [vmem:[%s530] sm:$0xf]
    %v532 = vld [vmem:[%s530 + $0x4] sm:$0xf]
    %v533 = vld [vmem:[%s530 + $0x8] sm:$0xf]
    %v534 = vld [vmem:[%s530 + $0xc] sm:$0xf]
    %v535 = vld [vmem:[%s530 + $0x10] sm:$0xf]
    %v536 = vld [vmem:[%s530 + $0x14] sm:$0xf]
    %v537 = vld [vmem:[%s530 + $0x18] sm:$0xf]
    %v538 = vld [vmem:[%s530 + $0x1c] sm:$0xf]
    %v539 = vld [vmem:[%s530 + $0x20] sm:$0xf]
    %v540 = vunpack.c.l.bf16 %v531
    %v541 = vunpack.c.l.bf16 %v532
    %v542 = vunpack.c.l.bf16 %v533
    %v543 = vunpack.c.l.bf16 %v534
    %v544 = vunpack.c.l.bf16 %v535
    %v545 = vunpack.c.l.bf16 %v536
    %v546 = vunpack.c.l.bf16 %v537
    %v547 = vunpack.c.l.bf16 %v538
    %v548 = vunpack.c.l.bf16 %v539
    %549 = vmatprep.subr.mxu0 0.0
    %550 = vmatpush1.msra.mxu0 %v540
    %551 = vmatprep.subr.mxu0 0.0
    %552 = vmatpush1.msra.mxu0 %v541
    %553 = vmatprep.subr.mxu0 0.0
    %554 = vmatpush1.msra.mxu0 %v542
    %555 = vmatprep.subr.mxu0 0.0
    %556 = vmatpush1.msra.mxu0 %v543
    %557 = vmatprep.subr.mxu0 0.0
    %558 = vmatpush1.msra.mxu0 %v544
    %559 = vmatprep.subr.mxu0 0.0
    %560 = vmatpush1.msra.mxu0 %v545
    %561 = vmatprep.subr.mxu0 0.0
    %562 = vmatpush1.msra.mxu0 %v546
    %563 = vmatprep.subr.mxu0 0.0
    %564 = vmatpush1.msra.mxu0 %v547
    %565 = vmatprep.subr.mxu0 0.0
    %566 = vmatpush1.msra.mxu0 %v548
    %567 = vmatprep.subr.mxu0 0.0
    %568 = vmatpush1.msra.mxu0 0.0
    %569 = vmatprep.subr.mxu0 0.0
    %570 = vmatpush1.msra.mxu0 0.0
    %571 = vmatprep.subr.mxu0 0.0
    %572 = vmatpush1.msra.mxu0 0.0
    %573 = vmatprep.subr.mxu0 0.0
    %574 = vmatpush1.msra.mxu0 0.0
    %575 = vmatprep.subr.mxu0 0.0
    %576 = vmatpush1.msra.mxu0 0.0
    %577 = vmatprep.subr.mxu0 0.0
    %578 = vmatpush1.msra.mxu0 0.0
    %579 = vmatprep.subr.mxu0 0.0
    %580 = vmatpush1.msra.mxu0 0.0
    %581 = vmatprep.subr.mxu0 0.0
    %582 = vmatpush1.msra.mxu0 0.0
    %583 = vmatprep.subr.mxu0 0.0
    %584 = vmatpush1.msra.mxu0 0.0
    %585 = vmatprep.subr.mxu0 0.0
    %586 = vmatpush1.msra.mxu0 0.0
    %587 = vmatprep.subr.mxu0 0.0
    %588 = vmatpush1.msra.mxu0 0.0
    %589 = vmatprep.subr.mxu0 0.0
    %590 = vmatpush1.msra.mxu0 0.0
    %591 = vmatprep.subr.mxu0 0.0
    %592 = vmatpush1.msra.mxu0 0.0
    %593 = vmatprep.subr.mxu0 0.0
    %594 = vmatpush1.msra.mxu0 0.0
    %595 = vmatprep.subr.mxu0 0.0
    %596 = vmatpush1.msra.mxu0 0.0
    %597 = vmatprep.subr.mxu0 0.0
    %598 = vmatpush1.msra.mxu0 0.0
    %599 = vmatprep.subr.mxu0 0.0
    %600 = vmatpush1.msra.mxu0 0.0
    %601 = vmatprep.subr.mxu0 0.0
    %602 = vmatpush1.msra.mxu0 0.0
    %603 = vmatprep.subr.mxu0 0.0
    %604 = vmatpush1.msra.mxu0 0.0
    %605 = vmatprep.subr.mxu0 0.0
    %606 = vmatpush1.msra.mxu0 0.0
    %607 = vmatprep.subr.mxu0 0.0
    %608 = vmatpush1.msra.mxu0 0.0
    %609 = vmatprep.subr.mxu0 0.0
    %610 = vmatpush1.msra.mxu0 0.0
    %611 = vmatprep.subr.mxu0 0.0
    %612 = vmatpush1.msra.mxu0 0.0
    %613 = vmatprep.mubr.f32.mxu0 0.0
    %614 = vmatmul.mubr.f32.gmra.mrb[0].mxu0 %v59
    %v615 = vpop.f32.mrb[0].mxu0
    %v616 = vadd.f32 0.0, %v615
    %v617 = vpop.f32.mrb[0].mxu0
    %618 = vdwg.mxu0
    %s619 = scalar_lea.vmem [#allocation7], 10
    %620 = vst.msk [vmem:[%s619] sm:$0x3] %vm131, %v616
    %s621 = scalar_lea.vmem [#allocation7], 26
    %622 = vst.msk [vmem:[%s621 - $0x2] sm:$0xc] %vm134, %v616
    %s623 = scalar_lea.vmem [#allocation7], 42
    %624 = vst.msk [vmem:[%s623 - $0x4] sm:$0x30] %vm137, %v616
    %s625 = scalar_lea.vmem [#allocation7], 58
    %626 = vst.msk [vmem:[%s625 - $0x6] sm:$0xc0] %vm140, %v616
    %s627 = scalar_lea.vmem [#allocation5], 216
    %v628 = vld [vmem:[%s627] sm:$0xf]
    %v629 = vld [vmem:[%s627 + $0x4] sm:$0xf]
    %v630 = vld [vmem:[%s627 + $0x8] sm:$0xf]
    %v631 = vld [vmem:[%s627 + $0xc] sm:$0xf]
    %v632 = vld [vmem:[%s627 + $0x10] sm:$0xf]
    %v633 = vld [vmem:[%s627 + $0x14] sm:$0xf]
    %v634 = vld [vmem:[%s627 + $0x18] sm:$0xf]
    %v635 = vld [vmem:[%s627 + $0x1c] sm:$0xf]
    %v636 = vld [vmem:[%s627 + $0x20] sm:$0xf]
    %v637 = vunpack.c.l.bf16 %v628
    %v638 = vunpack.c.l.bf16 %v629
    %v639 = vunpack.c.l.bf16 %v630
    %v640 = vunpack.c.l.bf16 %v631
    %v641 = vunpack.c.l.bf16 %v632
    %v642 = vunpack.c.l.bf16 %v633
    %v643 = vunpack.c.l.bf16 %v634
    %v644 = vunpack.c.l.bf16 %v635
    %v645 = vunpack.c.l.bf16 %v636
    %646 = vmatprep.subr.mxu0 0.0
    %647 = vmatpush1.msra.mxu0 %v637
    %648 = vmatprep.subr.mxu0 0.0
    %649 = vmatpush1.msra.mxu0 %v638
    %650 = vmatprep.subr.mxu0 0.0
    %651 = vmatpush1.msra.mxu0 %v639
    %652 = vmatprep.subr.mxu0 0.0
    %653 = vmatpush1.msra.mxu0 %v640
    %654 = vmatprep.subr.mxu0 0.0
    %655 = vmatpush1.msra.mxu0 %v641
    %656 = vmatprep.subr.mxu0 0.0
    %657 = vmatpush1.msra.mxu0 %v642
    %658 = vmatprep.subr.mxu0 0.0
    %659 = vmatpush1.msra.mxu0 %v643
    %660 = vmatprep.subr.mxu0 0.0
    %661 = vmatpush1.msra.mxu0 %v644
    %662 = vmatprep.subr.mxu0 0.0
    %663 = vmatpush1.msra.mxu0 %v645
    %664 = vmatprep.subr.mxu0 0.0
    %665 = vmatpush1.msra.mxu0 0.0
    %666 = vmatprep.subr.mxu0 0.0
    %667 = vmatpush1.msra.mxu0 0.0
    %668 = vmatprep.subr.mxu0 0.0
    %669 = vmatpush1.msra.mxu0 0.0
    %670 = vmatprep.subr.mxu0 0.0
    %671 = vmatpush1.msra.mxu0 0.0
    %672 = vmatprep.subr.mxu0 0.0
    %673 = vmatpush1.msra.mxu0 0.0
    %674 = vmatprep.subr.mxu0 0.0
    %675 = vmatpush1.msra.mxu0 0.0
    %676 = vmatprep.subr.mxu0 0.0
    %677 = vmatpush1.msra.mxu0 0.0
    %678 = vmatprep.subr.mxu0 0.0
    %679 = vmatpush1.msra.mxu0 0.0
    %680 = vmatprep.subr.mxu0 0.0
    %681 = vmatpush1.msra.mxu0 0.0
    %682 = vmatprep.subr.mxu0 0.0
    %683 = vmatpush1.msra.mxu0 0.0
    %684 = vmatprep.subr.mxu0 0.0
    %685 = vmatpush1.msra.mxu0 0.0
    %686 = vmatprep.subr.mxu0 0.0
    %687 = vmatpush1.msra.mxu0 0.0
    %688 = vmatprep.subr.mxu0 0.0
    %689 = vmatpush1.msra.mxu0 0.0
    %690 = vmatprep.subr.mxu0 0.0
    %691 = vmatpush1.msra.mxu0 0.0
    %692 = vmatprep.subr.mxu0 0.0
    %693 = vmatpush1.msra.mxu0 0.0
    %694 = vmatprep.subr.mxu0 0.0
    %695 = vmatpush1.msra.mxu0 0.0
    %696 = vmatprep.subr.mxu0 0.0
    %697 = vmatpush1.msra.mxu0 0.0
    %698 = vmatprep.subr.mxu0 0.0
    %699 = vmatpush1.msra.mxu0 0.0
    %700 = vmatprep.subr.mxu0 0.0
    %701 = vmatpush1.msra.mxu0 0.0
    %702 = vmatprep.subr.mxu0 0.0
    %703 = vmatpush1.msra.mxu0 0.0
    %704 = vmatprep.subr.mxu0 0.0
    %705 = vmatpush1.msra.mxu0 0.0
    %706 = vmatprep.subr.mxu0 0.0
    %707 = vmatpush1.msra.mxu0 0.0
    %708 = vmatprep.subr.mxu0 0.0
    %709 = vmatpush1.msra.mxu0 0.0
    %710 = vmatprep.mubr.f32.mxu0 0.0
    %711 = vmatmul.mubr.f32.gmra.mrb[0].mxu0 %v59
    %v712 = vpop.f32.mrb[0].mxu0
    %v713 = vadd.f32 0.0, %v712
    %v714 = vpop.f32.mrb[0].mxu0
    %715 = vdwg.mxu0
    %s716 = scalar_lea.vmem [#allocation7], 12
    %717 = vst.msk [vmem:[%s716] sm:$0x3] %vm131, %v713
    %s718 = scalar_lea.vmem [#allocation7], 28
    %719 = vst.msk [vmem:[%s718 - $0x2] sm:$0xc] %vm134, %v713
    %s720 = scalar_lea.vmem [#allocation7], 44
    %721 = vst.msk [vmem:[%s720 - $0x4] sm:$0x30] %vm137, %v713
    %s722 = scalar_lea.vmem [#allocation7], 60
    %723 = vst.msk [vmem:[%s722 - $0x6] sm:$0xc0] %vm140, %v713
    %s724 = scalar_lea.vmem [#allocation5], 252
    %v725 = vld [vmem:[%s724] sm:$0xf]
    %v726 = vld [vmem:[%s724 + $0x4] sm:$0xf]
    %v727 = vld [vmem:[%s724 + $0x8] sm:$0xf]
    %v728 = vld [vmem:[%s724 + $0xc] sm:$0xf]
    %v729 = vld [vmem:[%s724 + $0x10] sm:$0xf]
    %v730 = vld [vmem:[%s724 + $0x14] sm:$0xf]
    %v731 = vld [vmem:[%s724 + $0x18] sm:$0xf]
    %v732 = vld [vmem:[%s724 + $0x1c] sm:$0xf]
    %v733 = vld [vmem:[%s724 + $0x20] sm:$0xf]
    %v734 = vunpack.c.l.bf16 %v725
    %v735 = vunpack.c.l.bf16 %v726
    %v736 = vunpack.c.l.bf16 %v727
    %v737 = vunpack.c.l.bf16 %v728
    %v738 = vunpack.c.l.bf16 %v729
    %v739 = vunpack.c.l.bf16 %v730
    %v740 = vunpack.c.l.bf16 %v731
    %v741 = vunpack.c.l.bf16 %v732
    %v742 = vunpack.c.l.bf16 %v733
    %743 = vmatprep.subr.mxu0 0.0
    %744 = vmatpush1.msra.mxu0 %v734
    %745 = vmatprep.subr.mxu0 0.0
    %746 = vmatpush1.msra.mxu0 %v735
    %747 = vmatprep.subr.mxu0 0.0
    %748 = vmatpush1.msra.mxu0 %v736
    %749 = vmatprep.subr.mxu0 0.0
    %750 = vmatpush1.msra.mxu0 %v737
    %751 = vmatprep.subr.mxu0 0.0
    %752 = vmatpush1.msra.mxu0 %v738
    %753 = vmatprep.subr.mxu0 0.0
    %754 = vmatpush1.msra.mxu0 %v739
    %755 = vmatprep.subr.mxu0 0.0
    %756 = vmatpush1.msra.mxu0 %v740
    %757 = vmatprep.subr.mxu0 0.0
    %758 = vmatpush1.msra.mxu0 %v741
    %759 = vmatprep.subr.mxu0 0.0
    %760 = vmatpush1.msra.mxu0 %v742
    %761 = vmatprep.subr.mxu0 0.0
    %762 = vmatpush1.msra.mxu0 0.0
    %763 = vmatprep.subr.mxu0 0.0
    %764 = vmatpush1.msra.mxu0 0.0
    %765 = vmatprep.subr.mxu0 0.0
    %766 = vmatpush1.msra.mxu0 0.0
    %767 = vmatprep.subr.mxu0 0.0
    %768 = vmatpush1.msra.mxu0 0.0
    %769 = vmatprep.subr.mxu0 0.0
    %770 = vmatpush1.msra.mxu0 0.0
    %771 = vmatprep.subr.mxu0 0.0
    %772 = vmatpush1.msra.mxu0 0.0
    %773 = vmatprep.subr.mxu0 0.0
    %774 = vmatpush1.msra.mxu0 0.0
    %775 = vmatprep.subr.mxu0 0.0
    %776 = vmatpush1.msra.mxu0 0.0
    %777 = vmatprep.subr.mxu0 0.0
    %778 = vmatpush1.msra.mxu0 0.0
    %779 = vmatprep.subr.mxu0 0.0
    %780 = vmatpush1.msra.mxu0 0.0
    %781 = vmatprep.subr.mxu0 0.0
    %782 = vmatpush1.msra.mxu0 0.0
    %783 = vmatprep.subr.mxu0 0.0
    %784 = vmatpush1.msra.mxu0 0.0
    %785 = vmatprep.subr.mxu0 0.0
    %786 = vmatpush1.msra.mxu0 0.0
    %787 = vmatprep.subr.mxu0 0.0
    %788 = vmatpush1.msra.mxu0 0.0
    %789 = vmatprep.subr.mxu0 0.0
    %790 = vmatpush1.msra.mxu0 0.0
    %791 = vmatprep.subr.mxu0 0.0
    %792 = vmatpush1.msra.mxu0 0.0
    %793 = vmatprep.subr.mxu0 0.0
    %794 = vmatpush1.msra.mxu0 0.0
    %795 = vmatprep.subr.mxu0 0.0
    %796 = vmatpush1.msra.mxu0 0.0
    %797 = vmatprep.subr.mxu0 0.0
    %798 = vmatpush1.msra.mxu0 0.0
    %799 = vmatprep.subr.mxu0 0.0
    %800 = vmatpush1.msra.mxu0 0.0
    %801 = vmatprep.subr.mxu0 0.0
    %802 = vmatpush1.msra.mxu0 0.0
    %803 = vmatprep.subr.mxu0 0.0
    %804 = vmatpush1.msra.mxu0 0.0
    %805 = vmatprep.subr.mxu0 0.0
    %806 = vmatpush1.msra.mxu0 0.0
    %807 = vmatprep.mubr.f32.mxu0 0.0
    %808 = vmatmul.mubr.f32.gmra.mrb[0].mxu0 %v59
    %v809 = vpop.f32.mrb[0].mxu0
    %v810 = vadd.f32 0.0, %v809
    %v811 = vpop.f32.mrb[0].mxu0
    %812 = vdwg.mxu0
    %s813 = scalar_lea.vmem [#allocation7], 14
    %814 = vst.msk [vmem:[%s813] sm:$0x3] %vm131, %v810
    %s815 = scalar_lea.vmem [#allocation7], 30
    %816 = vst.msk [vmem:[%s815 - $0x2] sm:$0xc] %vm134, %v810
    %s817 = scalar_lea.vmem [#allocation7], 46
    %818 = vst.msk [vmem:[%s817 - $0x4] sm:$0x30] %vm137, %v810
    %s819 = scalar_lea.vmem [#allocation7], 62
    %820 = vst.msk [vmem:[%s819 - $0x6] sm:$0xc0] %vm140, %v810
    // Predicated region
    $region18: #{tpu_custom_call.1} parent=1 // pred_check
      _
    $region19: #{tpu_custom_call.1} parent=1 // pred_check_branch
      %822 = sbr.rel (0) target = $region21
    $region20: #{tpu_custom_call.1} parent=1 // pred_region
      %s824 = ssub.s32 1024, 1024
      %825 = vsyncadd [#allocation4], %s824
      %s826 = sshll.u32 [#allocation7], 4
      %s827 = int_to_ptr.vmem [resolvable:$true] %s826
      %832 = dma.vmem_to_hbm [thread:$0]  %s827, 1024, %s2, [#allocation4], 32, 32, 2
    $region21: #{tpu_custom_call.1} parent=1 // pred_fallthru
      _
    // Predicated region
    $region22: #{tpu_custom_call.1} parent=1 // pred_check
      _
    $region23: #{tpu_custom_call.1} parent=1 // pred_check_branch
      %834 = sbr.rel (0) target = $region25
    $region24: #{tpu_custom_call.1} parent=1 // pred_region
      %835 = dma.done [#allocation4], 1024
    $region25: #{tpu_custom_call.1} parent=1 // pred_fallthru
      _
    %836 = vsyncpa [#allocation3], 1
    %837 = vsyncpa [#allocation6], 1
    %838 = vsyncpa [#allocation4], 1

</llo_original>
